<compile_context>
chip_gen: v7x
topology: tpu7x:2x2x1
jax: 0.10.0
libtpu: 0.0.40
codegen_flags: <defaults>
</compile_context>

<pallas_src>
import math
import functools

import jax
import jax.numpy as jnp
from jax import lax
from jax.experimental import pallas as pl
from jax.experimental.pallas import tpu as pltpu

_LOG_CLAMP = math.log(1000.0 / 16.0)


# ----------------------------------------------------------------------------
# Fused kernel: 3x3 conv (im2col, one matmul) + ReLU + (cls|bbox) 1x1 matmul
#               + box decode + clamp + sigmoid + min-size, per row band.
# ----------------------------------------------------------------------------
def _rpn_fused_kernel(main_ref, halo_lo_ref, halo_hi_ref, w3_ref, b3_ref,
                      wh_ref, bh_ref, anc_ref, coord_ref, out_ref, *,
                      TH, PADW, C, A, stride_h, img_h, img_w, min_size):
    i = pl.program_id(0)
    R = TH * PADW

    # (TH + 2) padded rows of the feature map, flattened row-major.  The 8
    # trailing zero rows keep every tap slice in bounds (max overrun is 2).
    band = jnp.concatenate(
        [main_ref[...], halo_lo_ref[...], halo_hi_ref[...],
         jnp.zeros((8, C), jnp.float32)], axis=0)          # (R + 2*PADW + 8, C)

    # im2col: 9 contiguous row-window slices -> (R, 9C); ONE MXU matmul.
    taps = []
    for dy in range(3):
        for dx in range(3):
            s = dy * PADW + dx
            taps.append(band[s:s + R, :])
    patch = jnp.concatenate(taps, axis=1)                  # (R, 9C)

    rpn_feat = jnp.dot(patch, w3_ref[...], preferred_element_type=jnp.float32)
    rpn_feat = jnp.maximum(rpn_feat + b3_ref[...], 0.0)    # 3x3 conv + ReLU

    # cls (A) + bbox-reg (4A) fused into one matmul; columns are pre-permuted
    # in the wrapper to [cls | dx | dy | dw | dh] groups of width A.
    head = jnp.dot(rpn_feat, wh_ref[...], preferred_element_type=jnp.float32)
    head = head + bh_ref[...]                              # (R, 5A)

    logit = head[:, 0 * A:1 * A]
    dx_p = head[:, 1 * A:2 * A]
    dy_p = head[:, 2 * A:3 * A]
    dw_p = jnp.minimum(head[:, 3 * A:4 * A], _LOG_CLAMP)
    dh_p = jnp.minimum(head[:, 4 * A:5 * A], _LOG_CLAMP)

    # Anchors generated on the fly: per-anchor constants + per-row grid shifts.
    aw = anc_ref[0:1, :]                                   # (1, A) widths
    ah = anc_ref[1:2, :]                                   # (1, A) heights
    acx0 = anc_ref[2:3, :]                                 # (1, A) center offs
    acy0 = anc_ref[3:4, :]
    sx = coord_ref[:, 0:1]                                 # (R, 1) x * stride_w
    sy = coord_ref[:, 1:2] + (i * TH).astype(jnp.float32) * stride_h
    acx = sx + acx0                                        # (R, A)
    acy = sy + acy0

    # apply_regression_pred_to_anchors_or_proposals + clamp_boxes_to_image.
    pcx = dx_p * aw + acx
    pcy = dy_p * ah + acy
    pw = jnp.exp(dw_p) * aw
    ph = jnp.exp(dh_p) * ah

    x1 = jnp.clip(pcx - 0.5 * pw, 0.0, img_w)
    y1 = jnp.clip(pcy - 0.5 * ph, 0.0, img_h)
    x2 = jnp.clip(pcx + 0.5 * pw, 0.0, img_w)
    y2 = jnp.clip(pcy + 0.5 * ph, 0.0, img_h)

    # Exact sigmoid (not approx) so score ranking matches the reference.
    score = 1.0 / (1.0 + jnp.exp(-logit))
    keep = jnp.where((x2 - x1 >= min_size) & (y2 - y1 >= min_size),
                     jnp.float32(1.0), jnp.float32(0.0))

    # Compact decoded fields only: [x1 | y1 | x2 | y2 | score | keep], width 6A.
    out_ref[...] = jnp.concatenate([x1, y1, x2, y2, score, keep], axis=1)


# ----------------------------------------------------------------------------
# Anchor constants (same math / rounding as the PyTorch module, pure Python).
# ----------------------------------------------------------------------------
def _anchor_constants(scales, aspect_ratios):
    bw, bh_, bcx, bcy = [], [], [], []
    for ar in aspect_ratios:
        hr = math.sqrt(ar)
        wr = 1.0 / hr
        for s in scales:
            ws, hs = wr * float(s), hr * float(s)
            x1, x2 = float(round(-ws / 2.0)), float(round(ws / 2.0))
            y1, y2 = float(round(-hs / 2.0)), float(round(hs / 2.0))
            bw.append(x2 - x1)
            bh_.append(y2 - y1)
            bcx.append(0.5 * (x1 + x2))
            bcy.append(0.5 * (y1 + y2))
    return bw, bh_, bcx, bcy


def _pick_row_tile(H, PADW, C, min_blocks=8, patch_budget_bytes=8 << 20):
    """Largest TH dividing H with >= min_blocks grid steps and a bounded patch."""
    divisors = [d for d in range(1, H + 1) if H % d == 0]
    fits = [d for d in divisors if d * PADW * 9 * C * 4 <= patch_budget_bytes]
    if not fits:
        return 1
    pipelined = [d for d in fits if H // d >= min_blocks]
    return max(pipelined) if pipelined else max(fits)


# ----------------------------------------------------------------------------
# Wrapper: layout plumbing + filter_proposals (pre-NMS top-k).
# ----------------------------------------------------------------------------
def rpn_forward(params, image_shape, feat, scales, aspect_ratios,
                rpn_prenms_topk, min_size=16.0):
    """Eval-mode RegionProposalNetwork.forward."""
    _, C, H, W = feat.shape
    A = len(scales) * len(aspect_ratios)
    img_h, img_w = float(image_shape[0]), float(image_shape[1])
    stride_h = float(image_shape[0] // H)
    stride_w = float(image_shape[1] // W)

    PADW = ((W + 2 + 7) // 8) * 8            # conv pad=1 + round cols to mult 8
    TH = _pick_row_tile(H, PADW, C)
    nb = H // TH
    R = TH * PADW

    # Feature map: HWC, zero-padded, flattened row-major for contiguous taps.
    x_hwc = jnp.transpose(feat[0], (1, 2, 0))                       # (H, W, C)
    xp = jnp.pad(x_hwc, ((1, 1), (1, PADW - W - 1), (0, 0)))        # (H+2,PADW,C)
    xp_flat = xp.reshape((H + 2) * PADW, C)

    # Weights.
    w3_flat = params['w3'].reshape(9 * C, C)                        # (9C, C)
    b3 = params['b3'].reshape(1, C)
    # Head columns permuted to [cls(A) | dx(A) | dy(A) | dw(A) | dh(A)].
    w_box_r = params['w_box'].reshape(C, A, 4).transpose(0, 2, 1).reshape(C, 4 * A)
    wh = jnp.concatenate([params['w_cls'], w_box_r], axis=1)        # (C, 5A)
    b_box_r = params['b_box'].reshape(A, 4).T.reshape(4 * A)
    bh = jnp.concatenate([params['b_cls'], b_box_r]).reshape(1, 5 * A)

    # Per-anchor constants and per-row grid shift constants.
    bw, bhh, bcx, bcy = _anchor_constants(scales, aspect_ratios)
    anc_const = jnp.asarray([bw, bhh, bcx, bcy] + [[0.0] * A] * 4,
                            jnp.float32)                            # (8, A)
    ly, px = jnp.meshgrid(jnp.arange(TH, dtype=jnp.float32),
                          jnp.arange(PADW, dtype=jnp.float32), indexing='ij')
    coords = jnp.zeros((R, 8), jnp.float32)
    coords = coords.at[:, 0].set(px.reshape(-1) * stride_w)
    coords = coords.at[:, 1].set(ly.reshape(-1) * stride_h)

    kernel = functools.partial(
        _rpn_fused_kernel, TH=TH, PADW=PADW, C=C, A=A,
        stride_h=stride_h, img_h=img_h, img_w=img_w,
        min_size=float(min_size))

    out = pl.pallas_call(
        kernel,
        out_shape=jax.ShapeDtypeStruct((H * PADW, 6 * A), jnp.float32),
        grid=(nb,),
        in_specs=[
            pl.BlockSpec((R, C), lambda i: (i, 0)),                   # band rows
            pl.BlockSpec((PADW, C), lambda i: (i * TH + TH, 0)),      # halo row 0
            pl.BlockSpec((PADW, C), lambda i: (i * TH + TH + 1, 0)),  # halo row 1
            pl.BlockSpec((9 * C, C), lambda i: (0, 0)),               # conv W
            pl.BlockSpec((1, C), lambda i: (0, 0)),                   # conv b
            pl.BlockSpec((C, 5 * A), lambda i: (0, 0)),               # head W
            pl.BlockSpec((1, 5 * A), lambda i: (0, 0)),               # head b
            pl.BlockSpec((8, A), lambda i: (0, 0)),                   # anchor consts
            pl.BlockSpec((R, 8), lambda i: (0, 0)),                   # row shifts
        ],
        out_specs=pl.BlockSpec((R, 6 * A), lambda i: (i, 0)),
        compiler_params=pltpu.CompilerParams(
            dimension_semantics=("parallel",),
            vmem_limit_bytes=48 * 1024 * 1024),
    )(xp_flat, xp_flat, xp_flat, w3_flat, b3, wh, bh, anc_const, coords)

    # Drop the lane-rounding pad columns; unpack fields in (h, w, a) order.
    dec = out.reshape(H, PADW, 6 * A)[:, :W, :]                     # (H, W, 6A)
    x1 = dec[..., 0 * A:1 * A]
    y1 = dec[..., 1 * A:2 * A]
    x2 = dec[..., 2 * A:3 * A]
    y2 = dec[..., 3 * A:4 * A]
    boxes = jnp.stack([x1, y1, x2, y2], axis=-1).reshape(-1, 4)     # (N, 4)
    scores = dec[..., 4 * A:5 * A].reshape(-1)                      # (N,)
    keep = dec[..., 5 * A:6 * A].reshape(-1) > 0.5                  # (N,)

    # filter_proposals: pre-NMS top-k (static k) in the wrapper.
    N = H * W * A
    top_n = min(int(rpn_prenms_topk), N)
    top_scores, top_idx = lax.top_k(scores, top_n)
    proposals = boxes[top_idx]
    min_size_keep = keep[top_idx]

    # TODO(synk): class-agnostic NMS + post-NMS top-k (and actually dropping
    # min-size failures) are data-dependent / dynamic-shape; returning pre-NMS
    # top-k proposals plus the min-size keep mask instead.
    # TODO(synk): training branch (IoU target assignment, random pos/neg
    # sampling, BCE + smooth-L1 losses) not implemented — eval mode only.
    return {'proposals': proposals, 'scores': top_scores,
            'min_size_keep': min_size_keep}


def init_params(key, in_channels, num_anchors):
    C, A = in_channels, num_anchors
    k1, k2, k3 = jax.random.split(key, 3)
    # Init matches the module: normal(std=0.01) weights, zero biases.
    return {'w3': 0.01 * jax.random.normal(k1, (9, C, C), jnp.float32),
            'b3': jnp.zeros((1, C), jnp.float32),
            'w_cls': 0.01 * jax.random.normal(k2, (C, A), jnp.float32),
            'b_cls': jnp.zeros((A,), jnp.float32),
            'w_box': 0.01 * jax.random.normal(k3, (C, 4 * A), jnp.float32),
            'b_box': jnp.zeros((4 * A,), jnp.float32)}


if __name__ == "__main__":
    key = jax.random.PRNGKey(0)

    in_channels = 32
    H = W = 16
    image_shape = (64, 64)                     # (H, W); feature stride = 4
    scales = [16.0, 32.0]
    aspect_ratios = [0.5, 1.0, 2.0]
    num_anchors = len(scales) * len(aspect_ratios)          # 6
    rpn_test_prenms_topk = 300

    feat = jax.random.normal(jax.random.fold_in(key, 1),
                             (1, in_channels, H, W), jnp.float32)
    params = init_params(jax.random.fold_in(key, 2), in_channels, num_anchors)

    out = rpn_forward(params, image_shape, feat, scales, aspect_ratios,
                      rpn_test_prenms_topk)
    jax.block_until_ready(out)
    print("KERNEL_OK")
</pallas_src>

<mosaic_0001>
module attributes {stable_mosaic.version = 11 : i64} {
  func.func @_rpn_fused_kernel(%arg0: i32, %arg1: memref<48x32xf32, #tpu.memory_space<vmem>>, %arg2: memref<24x32xf32, #tpu.memory_space<vmem>>, %arg3: memref<24x32xf32, #tpu.memory_space<vmem>>, %arg4: memref<288x32xf32, #tpu.memory_space<vmem>>, %arg5: memref<1x32xf32, #tpu.memory_space<vmem>>, %arg6: memref<32x30xf32, #tpu.memory_space<vmem>>, %arg7: memref<1x30xf32, #tpu.memory_space<vmem>>, %arg8: memref<8x6xf32, #tpu.memory_space<vmem>>, %arg9: memref<48x8xf32, #tpu.memory_space<vmem>>, %arg10: memref<48x36xf32, #tpu.memory_space<vmem>>) attributes {dimension_semantics = [#tpu.dimension_semantics<parallel>], iteration_bounds = array<i64: 8>, scalar_prefetch = 0 : i64, scratch_operands = 0 : i64, tpu.core_type = #tpu.core_type<tc>, window_params = [{transform_indices = @transform_0, window_bounds = array<i64: 48, 32>}, {transform_indices = @transform_1, window_bounds = array<i64: 24, 32>}, {transform_indices = @transform_2, window_bounds = array<i64: 24, 32>}, {pipeline_mode = #tpu.pipeline_mode<synchronous>, transform_indices = @transform_3, window_bounds = array<i64: 288, 32>}, {pipeline_mode = #tpu.pipeline_mode<synchronous>, transform_indices = @transform_4, window_bounds = array<i64: 1, 32>}, {pipeline_mode = #tpu.pipeline_mode<synchronous>, transform_indices = @transform_5, window_bounds = array<i64: 32, 30>}, {pipeline_mode = #tpu.pipeline_mode<synchronous>, transform_indices = @transform_6, window_bounds = array<i64: 1, 30>}, {pipeline_mode = #tpu.pipeline_mode<synchronous>, transform_indices = @transform_7, window_bounds = array<i64: 8, 6>}, {pipeline_mode = #tpu.pipeline_mode<synchronous>, transform_indices = @transform_8, window_bounds = array<i64: 48, 8>}, {transform_indices = @transform_9, window_bounds = array<i64: 48, 36>}]} {
    %c0 = arith.constant 0 : index
    %c0_0 = arith.constant 0 : index
    %0 = vector.load %arg1[%c0, %c0_0] : memref<48x32xf32, #tpu.memory_space<vmem>>, vector<48x32xf32>
    %c0_1 = arith.constant 0 : index
    %c0_2 = arith.constant 0 : index
    %1 = vector.load %arg2[%c0_1, %c0_2] : memref<24x32xf32, #tpu.memory_space<vmem>>, vector<24x32xf32>
    %c0_3 = arith.constant 0 : index
    %c0_4 = arith.constant 0 : index
    %2 = vector.load %arg3[%c0_3, %c0_4] : memref<24x32xf32, #tpu.memory_space<vmem>>, vector<24x32xf32>
    %cst = arith.constant 0.000000e+00 : f32
    %3 = vector.broadcast %cst : f32 to vector<8x32xf32>
    %4 = tpu.concatenate %0, %1, %2, %3 in 0 : vector<48x32xf32>, vector<24x32xf32>, vector<24x32xf32>, vector<8x32xf32> -> vector<104x32xf32>
    %5 = vector.extract_strided_slice %4 {offsets = [0, 0], sizes = [48, 32], strides = [1, 1]} : vector<104x32xf32> to vector<48x32xf32>
    %6 = vector.extract_strided_slice %4 {offsets = [1, 0], sizes = [48, 32], strides = [1, 1]} : vector<104x32xf32> to vector<48x32xf32>
    %7 = vector.extract_strided_slice %4 {offsets = [2, 0], sizes = [48, 32], strides = [1, 1]} : vector<104x32xf32> to vector<48x32xf32>
    %8 = vector.extract_strided_slice %4 {offsets = [24, 0], sizes = [48, 32], strides = [1, 1]} : vector<104x32xf32> to vector<48x32xf32>
    %9 = vector.extract_strided_slice %4 {offsets = [25, 0], sizes = [48, 32], strides = [1, 1]} : vector<104x32xf32> to vector<48x32xf32>
    %10 = vector.extract_strided_slice %4 {offsets = [26, 0], sizes = [48, 32], strides = [1, 1]} : vector<104x32xf32> to vector<48x32xf32>
    %11 = vector.extract_strided_slice %4 {offsets = [48, 0], sizes = [48, 32], strides = [1, 1]} : vector<104x32xf32> to vector<48x32xf32>
    %12 = vector.extract_strided_slice %4 {offsets = [49, 0], sizes = [48, 32], strides = [1, 1]} : vector<104x32xf32> to vector<48x32xf32>
    %13 = vector.extract_strided_slice %4 {offsets = [50, 0], sizes = [48, 32], strides = [1, 1]} : vector<104x32xf32> to vector<48x32xf32>
    %14 = tpu.concatenate %5, %6, %7, %8, %9, %10, %11, %12, %13 in 1 : vector<48x32xf32>, vector<48x32xf32>, vector<48x32xf32>, vector<48x32xf32>, vector<48x32xf32>, vector<48x32xf32>, vector<48x32xf32>, vector<48x32xf32>, vector<48x32xf32> -> vector<48x288xf32>
    %c0_5 = arith.constant 0 : index
    %c0_6 = arith.constant 0 : index
    %15 = vector.load %arg4[%c0_5, %c0_6] : memref<288x32xf32, #tpu.memory_space<vmem>>, vector<288x32xf32>
    %cst_7 = arith.constant dense<0.000000e+00> : vector<48x32xf32>
    %16 = tpu.matmul %14, %15, %cst_7 {dimension_numbers = #tpu.dot_dimension_numbers<[1], [0], [0], [1], [0, 0, 1, 1], [], []>} : vector<48x288xf32>, vector<288x32xf32>, vector<48x32xf32> -> vector<48x32xf32>
    %c0_8 = arith.constant 0 : index
    %c0_9 = arith.constant 0 : index
    %17 = vector.load %arg5[%c0_8, %c0_9] : memref<1x32xf32, #tpu.memory_space<vmem>>, vector<1x32xf32>
    %18 = vector.broadcast %17 : vector<1x32xf32> to vector<48x32xf32>
    %19 = arith.addf %16, %18 : vector<48x32xf32>
    %cst_10 = arith.constant 0.000000e+00 : f32
    %20 = vector.broadcast %cst_10 : f32 to vector<48x32xf32>
    %21 = arith.maximumf %19, %20 : vector<48x32xf32>
    %c0_11 = arith.constant 0 : index
    %c0_12 = arith.constant 0 : index
    %22 = vector.load %arg6[%c0_11, %c0_12] : memref<32x30xf32, #tpu.memory_space<vmem>>, vector<32x30xf32>
    %cst_13 = arith.constant dense<0.000000e+00> : vector<48x30xf32>
    %23 = tpu.matmul %21, %22, %cst_13 {dimension_numbers = #tpu.dot_dimension_numbers<[1], [0], [0], [1], [0, 0, 1, 1], [], []>} : vector<48x32xf32>, vector<32x30xf32>, vector<48x30xf32> -> vector<48x30xf32>
    %c0_14 = arith.constant 0 : index
    %c0_15 = arith.constant 0 : index
    %24 = vector.load %arg7[%c0_14, %c0_15] : memref<1x30xf32, #tpu.memory_space<vmem>>, vector<1x30xf32>
    %25 = vector.broadcast %24 : vector<1x30xf32> to vector<48x30xf32>
    %26 = arith.addf %23, %25 : vector<48x30xf32>
    %27 = vector.extract_strided_slice %26 {offsets = [0, 0], sizes = [48, 6], strides = [1, 1]} : vector<48x30xf32> to vector<48x6xf32>
    %28 = vector.extract_strided_slice %26 {offsets = [0, 6], sizes = [48, 6], strides = [1, 1]} : vector<48x30xf32> to vector<48x6xf32>
    %29 = vector.extract_strided_slice %26 {offsets = [0, 12], sizes = [48, 6], strides = [1, 1]} : vector<48x30xf32> to vector<48x6xf32>
    %30 = vector.extract_strided_slice %26 {offsets = [0, 18], sizes = [48, 6], strides = [1, 1]} : vector<48x30xf32> to vector<48x6xf32>
    %cst_16 = arith.constant 4.13516665 : f32
    %31 = vector.broadcast %cst_16 : f32 to vector<48x6xf32>
    %32 = arith.minimumf %30, %31 : vector<48x6xf32>
    %33 = vector.extract_strided_slice %26 {offsets = [0, 24], sizes = [48, 6], strides = [1, 1]} : vector<48x30xf32> to vector<48x6xf32>
    %cst_17 = arith.constant 4.13516665 : f32
    %34 = vector.broadcast %cst_17 : f32 to vector<48x6xf32>
    %35 = arith.minimumf %33, %34 : vector<48x6xf32>
    %c0_18 = arith.constant 0 : index
    %c0_19 = arith.constant 0 : index
    %36 = vector.load %arg8[%c0_18, %c0_19] : memref<8x6xf32, #tpu.memory_space<vmem>>, vector<1x6xf32>
    %c1 = arith.constant 1 : index
    %c0_20 = arith.constant 0 : index
    %37 = vector.load %arg8[%c1, %c0_20] : memref<8x6xf32, #tpu.memory_space<vmem>>, vector<1x6xf32>
    %c2 = arith.constant 2 : index
    %c0_21 = arith.constant 0 : index
    %38 = vector.load %arg8[%c2, %c0_21] : memref<8x6xf32, #tpu.memory_space<vmem>>, vector<1x6xf32>
    %c3 = arith.constant 3 : index
    %c0_22 = arith.constant 0 : index
    %39 = vector.load %arg8[%c3, %c0_22] : memref<8x6xf32, #tpu.memory_space<vmem>>, vector<1x6xf32>
    %c0_23 = arith.constant 0 : index
    %c0_24 = arith.constant 0 : index
    %40 = vector.load %arg9[%c0_23, %c0_24] : memref<48x8xf32, #tpu.memory_space<vmem>>, vector<48x1xf32>
    %c0_25 = arith.constant 0 : index
    %c1_26 = arith.constant 1 : index
    %41 = vector.load %arg9[%c0_25, %c1_26] : memref<48x8xf32, #tpu.memory_space<vmem>>, vector<48x1xf32>
    %c2_i32 = arith.constant 2 : i32
    %42 = arith.muli %arg0, %c2_i32 : i32
    %43 = arith.sitofp %42 : i32 to f32
    %cst_27 = arith.constant 4.000000e+00 : f32
    %44 = arith.mulf %43, %cst_27 : f32
    %45 = vector.broadcast %44 : f32 to vector<48x1xf32>
    %46 = arith.addf %41, %45 : vector<48x1xf32>
    %47 = vector.broadcast %40 : vector<48x1xf32> to vector<48x6xf32>
    %48 = vector.broadcast %38 : vector<1x6xf32> to vector<48x6xf32>
    %49 = arith.addf %47, %48 : vector<48x6xf32>
    %50 = vector.broadcast %46 : vector<48x1xf32> to vector<48x6xf32>
    %51 = vector.broadcast %39 : vector<1x6xf32> to vector<48x6xf32>
    %52 = arith.addf %50, %51 : vector<48x6xf32>
    %53 = vector.broadcast %36 : vector<1x6xf32> to vector<48x6xf32>
    %54 = arith.mulf %28, %53 : vector<48x6xf32>
    %55 = arith.addf %54, %49 : vector<48x6xf32>
    %56 = vector.broadcast %37 : vector<1x6xf32> to vector<48x6xf32>
    %57 = arith.mulf %29, %56 : vector<48x6xf32>
    %58 = arith.addf %57, %52 : vector<48x6xf32>
    %59 = math.exp %32 : vector<48x6xf32>
    %60 = vector.broadcast %36 : vector<1x6xf32> to vector<48x6xf32>
    %61 = arith.mulf %59, %60 : vector<48x6xf32>
    %62 = math.exp %35 : vector<48x6xf32>
    %63 = vector.broadcast %37 : vector<1x6xf32> to vector<48x6xf32>
    %64 = arith.mulf %62, %63 : vector<48x6xf32>
    %cst_28 = arith.constant 5.000000e-01 : f32
    %65 = vector.broadcast %cst_28 : f32 to vector<48x6xf32>
    %66 = arith.mulf %65, %61 : vector<48x6xf32>
    %67 = arith.subf %55, %66 : vector<48x6xf32>
    %cst_29 = arith.constant 0.000000e+00 : f32
    %cst_30 = arith.constant 6.400000e+01 : f32
    %68 = vector.broadcast %cst_29 : f32 to vector<48x6xf32>
    %69 = arith.maximumf %68, %67 : vector<48x6xf32>
    %70 = vector.broadcast %cst_30 : f32 to vector<48x6xf32>
    %71 = arith.minimumf %70, %69 : vector<48x6xf32>
    %cst_31 = arith.constant 5.000000e-01 : f32
    %72 = vector.broadcast %cst_31 : f32 to vector<48x6xf32>
    %73 = arith.mulf %72, %64 : vector<48x6xf32>
    %74 = arith.subf %58, %73 : vector<48x6xf32>
    %cst_32 = arith.constant 0.000000e+00 : f32
    %cst_33 = arith.constant 6.400000e+01 : f32
    %75 = vector.broadcast %cst_32 : f32 to vector<48x6xf32>
    %76 = arith.maximumf %75, %74 : vector<48x6xf32>
    %77 = vector.broadcast %cst_33 : f32 to vector<48x6xf32>
    %78 = arith.minimumf %77, %76 : vector<48x6xf32>
    %cst_34 = arith.constant 5.000000e-01 : f32
    %79 = vector.broadcast %cst_34 : f32 to vector<48x6xf32>
    %80 = arith.mulf %79, %61 : vector<48x6xf32>
    %81 = arith.addf %55, %80 : vector<48x6xf32>
    %cst_35 = arith.constant 0.000000e+00 : f32
    %cst_36 = arith.constant 6.400000e+01 : f32
    %82 = vector.broadcast %cst_35 : f32 to vector<48x6xf32>
    %83 = arith.maximumf %82, %81 : vector<48x6xf32>
    %84 = vector.broadcast %cst_36 : f32 to vector<48x6xf32>
    %85 = arith.minimumf %84, %83 : vector<48x6xf32>
    %cst_37 = arith.constant 5.000000e-01 : f32
    %86 = vector.broadcast %cst_37 : f32 to vector<48x6xf32>
    %87 = arith.mulf %86, %64 : vector<48x6xf32>
    %88 = arith.addf %58, %87 : vector<48x6xf32>
    %cst_38 = arith.constant 0.000000e+00 : f32
    %cst_39 = arith.constant 6.400000e+01 : f32
    %89 = vector.broadcast %cst_38 : f32 to vector<48x6xf32>
    %90 = arith.maximumf %89, %88 : vector<48x6xf32>
    %91 = vector.broadcast %cst_39 : f32 to vector<48x6xf32>
    %92 = arith.minimumf %91, %90 : vector<48x6xf32>
    %cst_40 = arith.constant 0.000000e+00 : f32
    %93 = vector.broadcast %cst_40 : f32 to vector<48x6xf32>
    %94 = arith.subf %93, %27 : vector<48x6xf32>
    %95 = math.exp %94 : vector<48x6xf32>
    %cst_41 = arith.constant 1.000000e+00 : f32
    %96 = vector.broadcast %cst_41 : f32 to vector<48x6xf32>
    %97 = arith.addf %96, %95 : vector<48x6xf32>
    %cst_42 = arith.constant 1.000000e+00 : f32
    %98 = vector.broadcast %cst_42 : f32 to vector<48x6xf32>
    %99 = arith.divf %98, %97 : vector<48x6xf32>
    %100 = arith.subf %85, %71 : vector<48x6xf32>
    %cst_43 = arith.constant 1.600000e+01 : f32
    %101 = vector.broadcast %cst_43 : f32 to vector<48x6xf32>
    %102 = arith.cmpf oge, %100, %101 : vector<48x6xf32>
    %103 = arith.subf %92, %78 : vector<48x6xf32>
    %cst_44 = arith.constant 1.600000e+01 : f32
    %104 = vector.broadcast %cst_44 : f32 to vector<48x6xf32>
    %105 = arith.cmpf oge, %103, %104 : vector<48x6xf32>
    %106 = arith.andi %102, %105 : vector<48x6xi1>
    %cst_45 = arith.constant 1.000000e+00 : f32
    %cst_46 = arith.constant 0.000000e+00 : f32
    %107 = vector.broadcast %cst_45 : f32 to vector<48x6xf32>
    %108 = vector.broadcast %cst_46 : f32 to vector<48x6xf32>
    %109 = arith.select %106, %107, %108 : vector<48x6xi1>, vector<48x6xf32>
    %110 = tpu.concatenate %71, %78, %85, %92, %99, %109 in 1 : vector<48x6xf32>, vector<48x6xf32>, vector<48x6xf32>, vector<48x6xf32>, vector<48x6xf32>, vector<48x6xf32> -> vector<48x36xf32>
    %c0_47 = arith.constant 0 : index
    %c0_48 = arith.constant 0 : index
    %111 = vector.load %arg10[%c0_47, %c0_48] : memref<48x36xf32, #tpu.memory_space<vmem>>, vector<48x36xf32>
    tpu.vector_store %arg10[%c0_47, %c0_48], %110 {strides = array<i32>} : memref<48x36xf32, #tpu.memory_space<vmem>>, vector<48x36xf32>,
    return
  }
  func.func @transform_0(%arg0: i32) -> (i32, i32) {
    %c0_i32 = arith.constant 0 : i32
    %c0_i32_0 = arith.constant 0 : i32
    return %arg0, %c0_i32 : i32, i32
  }
  func.func @transform_1(%arg0: i32) -> (i32, i32) {
    %c2_i32 = arith.constant 2 : i32
    %0 = arith.muli %arg0, %c2_i32 : i32
    %c2_i32_0 = arith.constant 2 : i32
    %1 = arith.addi %0, %c2_i32_0 : i32
    %c0_i32 = arith.constant 0 : i32
    %c0_i32_1 = arith.constant 0 : i32
    return %1, %c0_i32 : i32, i32
  }
  func.func @transform_2(%arg0: i32) -> (i32, i32) {
    %c2_i32 = arith.constant 2 : i32
    %0 = arith.muli %arg0, %c2_i32 : i32
    %c2_i32_0 = arith.constant 2 : i32
    %1 = arith.addi %0, %c2_i32_0 : i32
    %c1_i32 = arith.constant 1 : i32
    %2 = arith.addi %1, %c1_i32 : i32
    %c0_i32 = arith.constant 0 : i32
    %c0_i32_1 = arith.constant 0 : i32
    return %2, %c0_i32 : i32, i32
  }
  func.func @transform_3(%arg0: i32) -> (i32, i32) {
    %c0_i32 = arith.constant 0 : i32
    %c0_i32_0 = arith.constant 0 : i32
    %c0_i32_1 = arith.constant 0 : i32
    return %c0_i32, %c0_i32_0 : i32, i32
  }
  func.func @transform_4(%arg0: i32) -> (i32, i32) {
    %c0_i32 = arith.constant 0 : i32
    %c0_i32_0 = arith.constant 0 : i32
    %c0_i32_1 = arith.constant 0 : i32
    return %c0_i32, %c0_i32_0 : i32, i32
  }
  func.func @transform_5(%arg0: i32) -> (i32, i32) {
    %c0_i32 = arith.constant 0 : i32
    %c0_i32_0 = arith.constant 0 : i32
    %c0_i32_1 = arith.constant 0 : i32
    return %c0_i32, %c0_i32_0 : i32, i32
  }
  func.func @transform_6(%arg0: i32) -> (i32, i32) {
    %c0_i32 = arith.constant 0 : i32
    %c0_i32_0 = arith.constant 0 : i32
    %c0_i32_1 = arith.constant 0 : i32
    return %c0_i32, %c0_i32_0 : i32, i32
  }
  func.func @transform_7(%arg0: i32) -> (i32, i32) {
    %c0_i32 = arith.constant 0 : i32
    %c0_i32_0 = arith.constant 0 : i32
    %c0_i32_1 = arith.constant 0 : i32
    return %c0_i32, %c0_i32_0 : i32, i32
  }
  func.func @transform_8(%arg0: i32) -> (i32, i32) {
    %c0_i32 = arith.constant 0 : i32
    %c0_i32_0 = arith.constant 0 : i32
    %c0_i32_1 = arith.constant 0 : i32
    return %c0_i32, %c0_i32_0 : i32, i32
  }
  func.func @transform_9(%arg0: i32) -> (i32, i32) {
    %c0_i32 = arith.constant 0 : i32
    %c0_i32_0 = arith.constant 0 : i32
    return %arg0, %c0_i32 : i32, i32
  }
}

</mosaic_0001>

<llo_original>
// kernel: tpu_custom_call.1
$region0: #{tpu_custom_call.1}
  #allocation0 [shape = 'u32[]', space=smem, size = 0x4, offset = 0x4, fixed_abs, tag = 'smem constant byte address 0x4 - core index']
  #allocation1 [shape = 'u32[144,128]{1,0:T(1,128)}', space=vmem, size = 0x12000, scoped, tag = 'internal scratch']
  %s0 = inlined_call_operand.vmem [shape: f32[432,32], index: 0, kind: input, shape index: {}]
  %s1 = inlined_call_operand.vmem [shape: f32[432,32], index: 1, kind: input, shape index: {}]
  %s2 = inlined_call_operand.vmem [shape: f32[432,32], index: 2, kind: input, shape index: {}]
  %s3 = inlined_call_operand.vmem [shape: f32[288,32], index: 3, kind: input, shape index: {}]
  %s4 = inlined_call_operand.vmem [shape: f32[1,32], index: 4, kind: input, shape index: {}]
  %s5 = inlined_call_operand.vmem [shape: f32[32,30], index: 5, kind: input, shape index: {}]
  %s6 = inlined_call_operand.vmem [shape: f32[1,30], index: 6, kind: input, shape index: {}]
  %s7 = inlined_call_operand.vmem [shape: f32[8,6], index: 7, kind: input, shape index: {}]
  %s8 = inlined_call_operand.vmem [shape: f32[48,8], index: 8, kind: input, shape index: {}]
  %s9 = inlined_call_operand.vmem [shape: f32[384,36], index: 9, kind: output, shape index: {}]
  %s10 = sld [smem:[#allocation0]]
  $region69: #{tpu_custom_call.1} parent=0
    _
  %s12 = ssub.s32 1, %s10
  %s13 = scalar_select 0, %s12, %s10
  loop: start=0, step=1, limit=10
  $region2: #{tpu_custom_call.1} parent=0 // loop_pre_header
    _
  $region3: #{tpu_custom_call.1} parent=0 // loop_header
    %s15 = sphi 0, %s19
    %p16 = scmp.ge.s32.totalorder %s15, 10
    %s25 = sphi 0, %s27
    %s28 = sphi 0, %s25
    %s29 = sphi 0, %s28
    %s45 = sphi 0, %s29
    %s55 = sphi 0, %s57
    %s58 = sphi 0, %s55
    %s59 = sphi 0, %s58
    %s75 = sphi 0, %s59
    %s85 = sphi 0, %s87
    %s88 = sphi 0, %s85
    %s89 = sphi 0, %s88
    %s105 = sphi 0, %s89
    %s109 = sphi 0, %s109
    %s111 = sphi 0, %s109
    %s112 = sphi 0, %s111
    %s126 = sphi 0, %s112
    %s130 = sphi 0, %s130
    %s132 = sphi 0, %s130
    %s133 = sphi 0, %s132
    %s147 = sphi 0, %s133
    %s151 = sphi 0, %s151
    %s153 = sphi 0, %s151
    %s154 = sphi 0, %s153
    %s168 = sphi 0, %s154
    %s172 = sphi 0, %s172
    %s174 = sphi 0, %s172
    %s175 = sphi 0, %s174
    %s189 = sphi 0, %s175
    %s193 = sphi 0, %s193
    %s195 = sphi 0, %s193
    %s196 = sphi 0, %s195
    %s210 = sphi 0, %s196
    %s214 = sphi 0, %s214
    %s216 = sphi 0, %s214
    %s217 = sphi 0, %s216
    %s231 = sphi 0, %s217
    %s237 = sphi 0, %s239
    %s240 = sphi 0, %s237
    %s241 = sphi 0, %s240
    %s257 = sphi 0, %s241
  $region4: #{tpu_custom_call.1} parent=0 // loop_header_branch
    %18 = sbr.rel (%p16) target = $region8
  $region5: #{tpu_custom_call.1} parent=0 // loop_body
    %s20 = ssub.s32 %s15, 1
    %s21 = ssub.s32 %s15, 2
    %s22 = sadd.s32 %s15, 1
    %s23 = ssub.s32 %s15, %s22
    %p24 = scmp.eq.s32.totalorder %s23, 0
    %s26 = sadd.s32 %s25, 1
    %s27 = scalar_select %p24, %s25, %s26
    %p30 = pneg %p24
    %p31 = scmp.eq.s32.totalorder %s15, 7
    %p32 = por %p30, %p31
    %p33 = scmp.ne.s32.totalorder %s25, %s28
    %p34 = scmp.eq.s32.totalorder %s15, 0
    %p35 = por %p33, %p34
    %p36 = scmp.ne.s32.totalorder %s25, %s28
    %p37 = scmp.eq.s32.totalorder %s20, 7
    %p38 = por %p36, %p37
    %p39 = scmp.ne.s32.totalorder %s28, %s29
    %p40 = scmp.eq.s32.totalorder %s20, 0
    %p41 = por %p39, %p40
    %p42 = scmp.ne.s32.totalorder %s28, %s29
    %p43 = scmp.eq.s32.totalorder %s21, 7
    %p44 = por %p42, %p43
    %p46 = scmp.ne.s32.totalorder %s29, %s45
    %p47 = scmp.eq.s32.totalorder %s21, 0
    %p48 = por %p46, %p47
    %s49 = smul.u32 %s15, 2
    %s50 = sadd.s32 %s49, 2
    %s51 = smul.u32 %s22, 2
    %s52 = sadd.s32 %s51, 2
    %s53 = ssub.s32 %s50, %s52
    %p54 = scmp.eq.s32.totalorder %s53, 0
    %s56 = sadd.s32 %s55, 1
    %s57 = scalar_select %p54, %s55, %s56
    %p60 = pneg %p54
    %p61 = scmp.eq.s32.totalorder %s15, 7
    %p62 = por %p60, %p61
    %p63 = scmp.ne.s32.totalorder %s55, %s58
    %p64 = scmp.eq.s32.totalorder %s15, 0
    %p65 = por %p63, %p64
    %p66 = scmp.ne.s32.totalorder %s55, %s58
    %p67 = scmp.eq.s32.totalorder %s20, 7
    %p68 = por %p66, %p67
    %p69 = scmp.ne.s32.totalorder %s58, %s59
    %p70 = scmp.eq.s32.totalorder %s20, 0
    %p71 = por %p69, %p70
    %p72 = scmp.ne.s32.totalorder %s58, %s59
    %p73 = scmp.eq.s32.totalorder %s21, 7
    %p74 = por %p72, %p73
    %p76 = scmp.ne.s32.totalorder %s59, %s75
    %p77 = scmp.eq.s32.totalorder %s21, 0
    %p78 = por %p76, %p77
    %s79 = smul.u32 %s15, 2
    %s80 = sadd.s32 %s79, 3
    %s81 = smul.u32 %s22, 2
    %s82 = sadd.s32 %s81, 3
    %s83 = ssub.s32 %s80, %s82
    %p84 = scmp.eq.s32.totalorder %s83, 0
    %s86 = sadd.s32 %s85, 1
    %s87 = scalar_select %p84, %s85, %s86
    %p90 = pneg %p84
    %p91 = scmp.eq.s32.totalorder %s15, 7
    %p92 = por %p90, %p91
    %p93 = scmp.ne.s32.totalorder %s85, %s88
    %p94 = scmp.eq.s32.totalorder %s15, 0
    %p95 = por %p93, %p94
    %p96 = scmp.ne.s32.totalorder %s85, %s88
    %p97 = scmp.eq.s32.totalorder %s20, 7
    %p98 = por %p96, %p97
    %p99 = scmp.ne.s32.totalorder %s88, %s89
    %p100 = scmp.eq.s32.totalorder %s20, 0
    %p101 = por %p99, %p100
    %p102 = scmp.ne.s32.totalorder %s88, %s89
    %p103 = scmp.eq.s32.totalorder %s21, 7
    %p104 = por %p102, %p103
    %p106 = scmp.ne.s32.totalorder %s89, %s105
    %p107 = scmp.eq.s32.totalorder %s21, 0
    %p108 = por %p106, %p107
    %s110 = sadd.s32 %s109, 1
    %p113 = scmp.eq.s32.totalorder %s15, 7
    %p114 = scmp.ne.s32.totalorder %s109, %s111
    %p115 = scmp.eq.s32.totalorder %s15, 0
    %p116 = por %p114, %p115
    %p117 = scmp.ne.s32.totalorder %s109, %s111
    %p118 = scmp.eq.s32.totalorder %s20, 7
    %p119 = por %p117, %p118
    %p120 = scmp.ne.s32.totalorder %s111, %s112
    %p121 = scmp.eq.s32.totalorder %s20, 0
    %p122 = por %p120, %p121
    %p123 = scmp.ne.s32.totalorder %s111, %s112
    %p124 = scmp.eq.s32.totalorder %s21, 7
    %p125 = por %p123, %p124
    %p127 = scmp.ne.s32.totalorder %s112, %s126
    %p128 = scmp.eq.s32.totalorder %s21, 0
    %p129 = por %p127, %p128
    %s131 = sadd.s32 %s130, 1
    %p134 = scmp.eq.s32.totalorder %s15, 7
    %p135 = scmp.ne.s32.totalorder %s130, %s132
    %p136 = scmp.eq.s32.totalorder %s15, 0
    %p137 = por %p135, %p136
    %p138 = scmp.ne.s32.totalorder %s130, %s132
    %p139 = scmp.eq.s32.totalorder %s20, 7
    %p140 = por %p138, %p139
    %p141 = scmp.ne.s32.totalorder %s132, %s133
    %p142 = scmp.eq.s32.totalorder %s20, 0
    %p143 = por %p141, %p142
    %p144 = scmp.ne.s32.totalorder %s132, %s133
    %p145 = scmp.eq.s32.totalorder %s21, 7
    %p146 = por %p144, %p145
    %p148 = scmp.ne.s32.totalorder %s133, %s147
    %p149 = scmp.eq.s32.totalorder %s21, 0
    %p150 = por %p148, %p149
    %s152 = sadd.s32 %s151, 1
    %p155 = scmp.eq.s32.totalorder %s15, 7
    %p156 = scmp.ne.s32.totalorder %s151, %s153
    %p157 = scmp.eq.s32.totalorder %s15, 0
    %p158 = por %p156, %p157
    %p159 = scmp.ne.s32.totalorder %s151, %s153
    %p160 = scmp.eq.s32.totalorder %s20, 7
    %p161 = por %p159, %p160
    %p162 = scmp.ne.s32.totalorder %s153, %s154
    %p163 = scmp.eq.s32.totalorder %s20, 0
    %p164 = por %p162, %p163
    %p165 = scmp.ne.s32.totalorder %s153, %s154
    %p166 = scmp.eq.s32.totalorder %s21, 7
    %p167 = por %p165, %p166
    %p169 = scmp.ne.s32.totalorder %s154, %s168
    %p170 = scmp.eq.s32.totalorder %s21, 0
    %p171 = por %p169, %p170
    %s173 = sadd.s32 %s172, 1
    %p176 = scmp.eq.s32.totalorder %s15, 7
    %p177 = scmp.ne.s32.totalorder %s172, %s174
    %p178 = scmp.eq.s32.totalorder %s15, 0
    %p179 = por %p177, %p178
    %p180 = scmp.ne.s32.totalorder %s172, %s174
    %p181 = scmp.eq.s32.totalorder %s20, 7
    %p182 = por %p180, %p181
    %p183 = scmp.ne.s32.totalorder %s174, %s175
    %p184 = scmp.eq.s32.totalorder %s20, 0
    %p185 = por %p183, %p184
    %p186 = scmp.ne.s32.totalorder %s174, %s175
    %p187 = scmp.eq.s32.totalorder %s21, 7
    %p188 = por %p186, %p187
    %p190 = scmp.ne.s32.totalorder %s175, %s189
    %p191 = scmp.eq.s32.totalorder %s21, 0
    %p192 = por %p190, %p191
    %s194 = sadd.s32 %s193, 1
    %p197 = scmp.eq.s32.totalorder %s15, 7
    %p198 = scmp.ne.s32.totalorder %s193, %s195
    %p199 = scmp.eq.s32.totalorder %s15, 0
    %p200 = por %p198, %p199
    %p201 = scmp.ne.s32.totalorder %s193, %s195
    %p202 = scmp.eq.s32.totalorder %s20, 7
    %p203 = por %p201, %p202
    %p204 = scmp.ne.s32.totalorder %s195, %s196
    %p205 = scmp.eq.s32.totalorder %s20, 0
    %p206 = por %p204, %p205
    %p207 = scmp.ne.s32.totalorder %s195, %s196
    %p208 = scmp.eq.s32.totalorder %s21, 7
    %p209 = por %p207, %p208
    %p211 = scmp.ne.s32.totalorder %s196, %s210
    %p212 = scmp.eq.s32.totalorder %s21, 0
    %p213 = por %p211, %p212
    %s215 = sadd.s32 %s214, 1
    %p218 = scmp.eq.s32.totalorder %s15, 7
    %p219 = scmp.ne.s32.totalorder %s214, %s216
    %p220 = scmp.eq.s32.totalorder %s15, 0
    %p221 = por %p219, %p220
    %p222 = scmp.ne.s32.totalorder %s214, %s216
    %p223 = scmp.eq.s32.totalorder %s20, 7
    %p224 = por %p222, %p223
    %p225 = scmp.ne.s32.totalorder %s216, %s217
    %p226 = scmp.eq.s32.totalorder %s20, 0
    %p227 = por %p225, %p226
    %p228 = scmp.ne.s32.totalorder %s216, %s217
    %p229 = scmp.eq.s32.totalorder %s21, 7
    %p230 = por %p228, %p229
    %p232 = scmp.ne.s32.totalorder %s217, %s231
    %p233 = scmp.eq.s32.totalorder %s21, 0
    %p234 = por %p232, %p233
    %s235 = ssub.s32 %s15, %s22
    %p236 = scmp.eq.s32.totalorder %s235, 0
    %s238 = sadd.s32 %s237, 1
    %s239 = scalar_select %p236, %s237, %s238
    %p242 = pneg %p236
    %p243 = scmp.eq.s32.totalorder %s15, 7
    %p244 = por %p242, %p243
    %p245 = scmp.ne.s32.totalorder %s237, %s240
    %p246 = scmp.eq.s32.totalorder %s15, 0
    %p247 = por %p245, %p246
    %p248 = scmp.ne.s32.totalorder %s237, %s240
    %p249 = scmp.eq.s32.totalorder %s20, 7
    %p250 = por %p248, %p249
    %p251 = scmp.ne.s32.totalorder %s240, %s241
    %p252 = scmp.eq.s32.totalorder %s20, 0
    %p253 = por %p251, %p252
    %p254 = scmp.ne.s32.totalorder %s240, %s241
    %p255 = scmp.eq.s32.totalorder %s21, 7
    %p256 = por %p254, %p255
    %p258 = scmp.ne.s32.totalorder %s241, %s257
    %p259 = scmp.eq.s32.totalorder %s21, 0
    %p260 = por %p258, %p259
    %p261 = scmp.le.s32.totalorder 1, %s15
    %p262 = scmp.lt.s32.totalorder %s15, 9
    %p263 = pnand %p261, %p262
    %p264 = pneg %p263
    // Predicated region
    $region9: #{tpu_custom_call.1} parent=5 // pred_check
      _
    $region10: #{tpu_custom_call.1} parent=5 // pred_check_branch
      %266 = sbr.rel (%p263) target = $region12
    $region11: #{tpu_custom_call.1} parent=5 // pred_region
      %s267 = ssub.s32 %s15, 1
      // Predicated region
      $region13: #{tpu_custom_call.1} parent=11 // pred_check
        %p268 = pneg %p122
      $region14: #{tpu_custom_call.1} parent=11 // pred_check_branch
        %270 = sbr.rel (%p268) target = $region16
      $region15: #{tpu_custom_call.1} parent=11 // pred_region
        _
      $region16: #{tpu_custom_call.1} parent=11 // pred_fallthru
        _
      // Predicated region
      $region17: #{tpu_custom_call.1} parent=11 // pred_check
        %p271 = pneg %p143
      $region18: #{tpu_custom_call.1} parent=11 // pred_check_branch
        %273 = sbr.rel (%p271) target = $region20
      $region19: #{tpu_custom_call.1} parent=11 // pred_region
        _
      $region20: #{tpu_custom_call.1} parent=11 // pred_fallthru
        _
      // Predicated region
      $region21: #{tpu_custom_call.1} parent=11 // pred_check
        %p274 = pneg %p164
      $region22: #{tpu_custom_call.1} parent=11 // pred_check_branch
        %276 = sbr.rel (%p274) target = $region24
      $region23: #{tpu_custom_call.1} parent=11 // pred_region
        _
      $region24: #{tpu_custom_call.1} parent=11 // pred_fallthru
        _
      // Predicated region
      $region25: #{tpu_custom_call.1} parent=11 // pred_check
        %p277 = pneg %p185
      $region26: #{tpu_custom_call.1} parent=11 // pred_check_branch
        %279 = sbr.rel (%p277) target = $region28
      $region27: #{tpu_custom_call.1} parent=11 // pred_region
        _
      $region28: #{tpu_custom_call.1} parent=11 // pred_fallthru
        _
      // Predicated region
      $region29: #{tpu_custom_call.1} parent=11 // pred_check
        %p280 = pneg %p206
      $region30: #{tpu_custom_call.1} parent=11 // pred_check_branch
        %282 = sbr.rel (%p280) target = $region32
      $region31: #{tpu_custom_call.1} parent=11 // pred_region
        _
      $region32: #{tpu_custom_call.1} parent=11 // pred_fallthru
        _
      // Predicated region
      $region33: #{tpu_custom_call.1} parent=11 // pred_check
        %p283 = pneg %p227
      $region34: #{tpu_custom_call.1} parent=11 // pred_check_branch
        %285 = sbr.rel (%p283) target = $region36
      $region35: #{tpu_custom_call.1} parent=11 // pred_region
        _
      $region36: #{tpu_custom_call.1} parent=11 // pred_fallthru
        _
    $region12: #{tpu_custom_call.1} parent=5 // pred_fallthru
      _
    %p286 = scmp.lt.s32.totalorder %s15, 8
    // Predicated region
    $region37: #{tpu_custom_call.1} parent=5 // pred_check
      %p287 = pneg %p286
    $region38: #{tpu_custom_call.1} parent=5 // pred_check_branch
      %289 = sbr.rel (%p287) target = $region40
    $region39: #{tpu_custom_call.1} parent=5 // pred_region
      // Predicated region
      $region41: #{tpu_custom_call.1} parent=39 // pred_check
        %p290 = pneg %p35
      $region42: #{tpu_custom_call.1} parent=39 // pred_check_branch
        %292 = sbr.rel (%p290) target = $region44
      $region43: #{tpu_custom_call.1} parent=39 // pred_region
        %s293 = smul.u32 6, %s15
        %p294 = scmp.lt.s32.totalorder %s293, 53
        %s295 = scalar_select %p294, %s293, 53
        %s296 = smul.addr %s295, 8
        %s297 = scalar_lea.vmem %s0, %s296
        %s298 = smul.u32 6, %s15
      $region44: #{tpu_custom_call.1} parent=39 // pred_fallthru
        _
      // Predicated region
      $region45: #{tpu_custom_call.1} parent=39 // pred_check
        %p299 = pneg %p65
      $region46: #{tpu_custom_call.1} parent=39 // pred_check_branch
        %301 = sbr.rel (%p299) target = $region48
      $region47: #{tpu_custom_call.1} parent=39 // pred_region
        %s302 = smul.u32 %s15, 2
        %s303 = sadd.s32 %s302, 2
        %s304 = smul.u32 3, %s303
        %p305 = scmp.lt.s32.totalorder %s304, 53
        %s306 = scalar_select %p305, %s304, 53
        %s307 = smul.addr %s306, 8
        %s308 = scalar_lea.vmem %s1, %s307
        %s309 = smul.u32 %s15, 2
        %s310 = sadd.s32 %s309, 2
        %s311 = smul.u32 3, %s310
      $region48: #{tpu_custom_call.1} parent=39 // pred_fallthru
        _
      // Predicated region
      $region49: #{tpu_custom_call.1} parent=39 // pred_check
        %p312 = pneg %p95
      $region50: #{tpu_custom_call.1} parent=39 // pred_check_branch
        %314 = sbr.rel (%p312) target = $region52
      $region51: #{tpu_custom_call.1} parent=39 // pred_region
        %s315 = smul.u32 %s15, 2
        %s316 = sadd.s32 %s315, 3
        %s317 = smul.u32 3, %s316
        %p318 = scmp.lt.s32.totalorder %s317, 53
        %s319 = scalar_select %p318, %s317, 53
        %s320 = smul.addr %s319, 8
        %s321 = scalar_lea.vmem %s2, %s320
        %s322 = smul.u32 %s15, 2
        %s323 = sadd.s32 %s322, 3
        %s324 = smul.u32 3, %s323
      $region52: #{tpu_custom_call.1} parent=39 // pred_fallthru
        _
    $region40: #{tpu_custom_call.1} parent=5 // pred_fallthru
      _
    %p325 = scmp.le.s32.totalorder 1, %s15
    %p326 = scmp.lt.s32.totalorder %s15, 9
    %p327 = pnand %p325, %p326
    %p328 = pneg %p327
    // Predicated region
    $region53: #{tpu_custom_call.1} parent=5 // pred_check
      _
    $region54: #{tpu_custom_call.1} parent=5 // pred_check_branch
      %330 = sbr.rel (%p327) target = $region56
    $region55: #{tpu_custom_call.1} parent=5 // pred_region
      %s331 = ssub.s32 %s15, 1
      %s332 = smul.u32 6, %s20
      %p333 = scmp.lt.s32.totalorder %s332, 53
      %s334 = scalar_select %p333, %s332, 53
      %s335 = smul.addr %s334, 8
      %s336 = scalar_lea.vmem %s0, %s335
      %p337 = pneg %p41
      %p338 = pneg %p38
      %s339 = smul.u32 %s20, 2
      %s340 = sadd.s32 %s339, 2
      %s341 = smul.u32 3, %s340
      %p342 = scmp.lt.s32.totalorder %s341, 53
      %s343 = scalar_select %p342, %s341, 53
      %s344 = smul.addr %s343, 8
      %s345 = scalar_lea.vmem %s1, %s344
      %p346 = pneg %p71
      %p347 = pneg %p68
      %s348 = smul.u32 %s20, 2
      %s349 = sadd.s32 %s348, 3
      %s350 = smul.u32 3, %s349
      %p351 = scmp.lt.s32.totalorder %s350, 53
      %s352 = scalar_select %p351, %s350, 53
      %s353 = smul.addr %s352, 8
      %s354 = scalar_lea.vmem %s2, %s353
      %p355 = pneg %p101
      %p356 = pneg %p98
      %p357 = pneg %p122
      %p358 = pneg %p119
      %p359 = pneg %p143
      %p360 = pneg %p140
      %p361 = pneg %p164
      %p362 = pneg %p161
      %p363 = pneg %p185
      %p364 = pneg %p182
      %p365 = pneg %p206
      %p366 = pneg %p203
      %p367 = pneg %p227
      %p368 = pneg %p224
      %p369 = pneg %p253
      %p370 = pneg %p250
      %s371 = smul.u32 6, %s20
      %p372 = scmp.lt.s32.totalorder %s371, 47
      %s373 = scalar_select %p372, %s371, 47
      %s374 = smul.addr %s373, 8
      %s375 = scalar_lea.vmem %s9, %s374
      %s376 = smul.u32 6, %s20
      %p377 = scmp.lt.s32.totalorder %s376, 53
      %s378 = scalar_select %p377, %s376, 53
      %s379 = smul.addr %s378, 8
      %s380 = scalar_lea.vmem %s0, %s379
      %s381 = smul.u32 6, %s20
      %s382 = smul.u32 %s20, 2
      %s383 = sadd.s32 %s382, 2
      %s384 = smul.u32 3, %s383
      %p385 = scmp.lt.s32.totalorder %s384, 53
      %s386 = scalar_select %p385, %s384, 53
      %s387 = smul.addr %s386, 8
      %s388 = scalar_lea.vmem %s1, %s387
      %s389 = smul.u32 %s20, 2
      %s390 = sadd.s32 %s389, 2
      %s391 = smul.u32 3, %s390
      %s392 = smul.u32 %s20, 2
      %s393 = sadd.s32 %s392, 3
      %s394 = smul.u32 3, %s393
      %p395 = scmp.lt.s32.totalorder %s394, 53
      %s396 = scalar_select %p395, %s394, 53
      %s397 = smul.addr %s396, 8
      %s398 = scalar_lea.vmem %s2, %s397
      %s399 = smul.u32 %s20, 2
      %s400 = sadd.s32 %s399, 3
      %s401 = smul.u32 3, %s400
      %s402 = smul.u32 6, %s20
      %p403 = scmp.lt.s32.totalorder %s402, 47
      %s404 = scalar_select %p403, %s402, 47
      %s405 = smul.addr %s404, 8
      %s406 = scalar_lea.vmem %s9, %s405
      %s407 = smul.u32 6, %s20
      %v408 = vld [vmem:[%s380] sm:$0xff]
      %v409 = vld [vmem:[%s380 + $0x8] sm:$0xff]
      %v410 = vld [vmem:[%s380 + $0x10] sm:$0xff]
      %v411 = vld [vmem:[%s380 + $0x18] sm:$0xff]
      %v412 = vld [vmem:[%s380 + $0x20] sm:$0xff]
      %v413 = vld [vmem:[%s380 + $0x28] sm:$0xff]
      %v414 = vld [vmem:[%s388] sm:$0xff]
      %v415 = vld [vmem:[%s388 + $0x8] sm:$0xff]
      %v416 = vld [vmem:[%s388 + $0x10] sm:$0xff]
      %v417 = vld [vmem:[%s398] sm:$0xff]
      %v418 = vld [vmem:[%s398 + $0x8] sm:$0xff]
      %v419 = vld [vmem:[%s398 + $0x10] sm:$0xff]
      %vm427 = vcmask 1046528
      %v428 = vrot.slane %v408, 1
      %v429 = vrot.slane %v409, 1
      %v430 = vsel %vm427, %v428, %v429
      %v431 = vrot.slane %v410, 1
      %v432 = vsel %vm427, %v429, %v431
      %v433 = vrot.slane %v411, 1
      %v434 = vsel %vm427, %v431, %v433
      %v435 = vrot.slane %v412, 1
      %v436 = vsel %vm427, %v433, %v435
      %v437 = vrot.slane %v413, 1
      %v438 = vsel %vm427, %v435, %v437
      %v439 = vrot.slane %v414, 1
      %v440 = vsel %vm427, %v437, %v439
      %441 = vrot.lane.b32.xlu0 %v430, 32
      %v442 = vpop.permute.xlu0 %441
      %443 = vrot.lane.b32.xlu0 %v432, 32
      %v444 = vpop.permute.xlu0 %443
      %445 = vrot.lane.b32.xlu0 %v434, 32
      %v446 = vpop.permute.xlu0 %445
      %447 = vrot.lane.b32.xlu0 %v436, 32
      %v448 = vpop.permute.xlu0 %447
      %449 = vrot.lane.b32.xlu0 %v438, 32
      %v450 = vpop.permute.xlu0 %449
      %451 = vrot.lane.b32.xlu0 %v440, 32
      %v452 = vpop.permute.xlu0 %451
      %vm459 = vcmask 1045504
      %v460 = vrot.slane %v408, 2
      %v461 = vrot.slane %v409, 2
      %v462 = vsel %vm459, %v460, %v461
      %v463 = vrot.slane %v410, 2
      %v464 = vsel %vm459, %v461, %v463
      %v465 = vrot.slane %v411, 2
      %v466 = vsel %vm459, %v463, %v465
      %v467 = vrot.slane %v412, 2
      %v468 = vsel %vm459, %v465, %v467
      %v469 = vrot.slane %v413, 2
      %v470 = vsel %vm459, %v467, %v469
      %v471 = vrot.slane %v414, 2
      %v472 = vsel %vm459, %v469, %v471
      %473 = vrot.lane.b32.xlu0 %v462, 64
      %v474 = vpop.permute.xlu0 %473
      %475 = vrot.lane.b32.xlu0 %v464, 64
      %v476 = vpop.permute.xlu0 %475
      %477 = vrot.lane.b32.xlu0 %v466, 64
      %v478 = vpop.permute.xlu0 %477
      %479 = vrot.lane.b32.xlu0 %v468, 64
      %v480 = vpop.permute.xlu0 %479
      %481 = vrot.lane.b32.xlu0 %v470, 64
      %v482 = vpop.permute.xlu0 %481
      %483 = vrot.lane.b32.xlu0 %v472, 64
      %v484 = vpop.permute.xlu0 %483
      %493 = vrot.lane.b32.xlu0 %v411, 96
      %v494 = vpop.permute.xlu0 %493
      %495 = vrot.lane.b32.xlu0 %v412, 96
      %v496 = vpop.permute.xlu0 %495
      %497 = vrot.lane.b32.xlu0 %v413, 96
      %v498 = vpop.permute.xlu0 %497
      %499 = vrot.lane.b32.xlu0 %v414, 96
      %v500 = vpop.permute.xlu0 %499
      %501 = vrot.lane.b32.xlu0 %v415, 96
      %v502 = vpop.permute.xlu0 %501
      %503 = vrot.lane.b32.xlu0 %v416, 96
      %v504 = vpop.permute.xlu0 %503
      %v512 = vrot.slane %v415, 1
      %v513 = vsel %vm427, %v439, %v512
      %v514 = vrot.slane %v416, 1
      %v515 = vsel %vm427, %v512, %v514
      %v516 = vrot.slane %v417, 1
      %v517 = vsel %vm427, %v514, %v516
      %v524 = vrot.slane %v415, 2
      %v525 = vsel %vm459, %v471, %v524
      %v526 = vrot.slane %v416, 2
      %v527 = vsel %vm459, %v524, %v526
      %v528 = vrot.slane %v417, 2
      %v529 = vsel %vm459, %v526, %v528
      %530 = vrot.lane.b32.xlu0 %v468, 32
      %v531 = vpop.permute.xlu0 %530
      %532 = vrot.lane.b32.xlu0 %v470, 32
      %v533 = vpop.permute.xlu0 %532
      %534 = vrot.lane.b32.xlu0 %v472, 32
      %v535 = vpop.permute.xlu0 %534
      %536 = vrot.lane.b32.xlu0 %v525, 32
      %v537 = vpop.permute.xlu0 %536
      %538 = vrot.lane.b32.xlu0 %v527, 32
      %v539 = vpop.permute.xlu0 %538
      %540 = vrot.lane.b32.xlu0 %v529, 32
      %v541 = vpop.permute.xlu0 %540
      %550 = vrot.lane.b32.xlu0 %v414, 64
      %v551 = vpop.permute.xlu0 %550
      %552 = vrot.lane.b32.xlu0 %v415, 64
      %v553 = vpop.permute.xlu0 %552
      %554 = vrot.lane.b32.xlu0 %v416, 64
      %v555 = vpop.permute.xlu0 %554
      %556 = vrot.lane.b32.xlu0 %v417, 64
      %v557 = vpop.permute.xlu0 %556
      %558 = vrot.lane.b32.xlu0 %v418, 64
      %v559 = vpop.permute.xlu0 %558
      %560 = vrot.lane.b32.xlu0 %v419, 64
      %v561 = vpop.permute.xlu0 %560
      %v569 = vrot.slane %v418, 1
      %v570 = vsel %vm427, %v516, %v569
      %v571 = vrot.slane %v419, 1
      %v572 = vsel %vm427, %v569, %v571
      %v573 = vrot.slane 0.0, 1
      %v574 = vsel %vm427, %v571, %v573
      %575 = vrot.lane.b32.xlu0 %v513, 96
      %v576 = vpop.permute.xlu0 %575
      %577 = vrot.lane.b32.xlu0 %v515, 96
      %v578 = vpop.permute.xlu0 %577
      %579 = vrot.lane.b32.xlu0 %v517, 96
      %v580 = vpop.permute.xlu0 %579
      %581 = vrot.lane.b32.xlu0 %v570, 96
      %v582 = vpop.permute.xlu0 %581
      %583 = vrot.lane.b32.xlu0 %v572, 96
      %v584 = vpop.permute.xlu0 %583
      %585 = vrot.lane.b32.xlu0 %v574, 96
      %v586 = vpop.permute.xlu0 %585
      %v593 = vrot.slane %v418, 2
      %v594 = vsel %vm459, %v528, %v593
      %v595 = vrot.slane %v419, 2
      %v596 = vsel %vm459, %v593, %v595
      %v597 = vrot.slane 0.0, 2
      %v598 = vsel %vm459, %v595, %v597
      %vm599 = vcmask 261120
      %v600 = vsel %vm599, %v408, %v442
      %v601 = vsel %vm599, %v409, %v444
      %v602 = vsel %vm599, %v410, %v446
      %v603 = vsel %vm599, %v411, %v448
      %v604 = vsel %vm599, %v412, %v450
      %v605 = vsel %vm599, %v413, %v452
      %vm606 = vcmask 523264
      %v607 = vsel %vm606, %v600, %v474
      %v608 = vsel %vm606, %v601, %v476
      %v609 = vsel %vm606, %v602, %v478
      %v610 = vsel %vm606, %v603, %v480
      %v611 = vsel %vm606, %v604, %v482
      %v612 = vsel %vm606, %v605, %v484
      %vm613 = vcmask 785408
      %v614 = vsel %vm613, %v607, %v494
      %v615 = vsel %vm613, %v608, %v496
      %v616 = vsel %vm613, %v609, %v498
      %v617 = vsel %vm613, %v610, %v500
      %v618 = vsel %vm613, %v611, %v502
      %v619 = vsel %vm613, %v612, %v504
      %v620 = vsel %vm599, %v436, %v531
      %v621 = vsel %vm599, %v438, %v533
      %v622 = vsel %vm599, %v440, %v535
      %v623 = vsel %vm599, %v513, %v537
      %v624 = vsel %vm599, %v515, %v539
      %v625 = vsel %vm599, %v517, %v541
      %v626 = vsel %vm606, %v620, %v551
      %v627 = vsel %vm606, %v621, %v553
      %v628 = vsel %vm606, %v622, %v555
      %v629 = vsel %vm606, %v623, %v557
      %v630 = vsel %vm606, %v624, %v559
      %v631 = vsel %vm606, %v625, %v561
      %v632 = vsel %vm613, %v626, %v576
      %v633 = vsel %vm613, %v627, %v578
      %v634 = vsel %vm613, %v628, %v580
      %v635 = vsel %vm613, %v629, %v582
      %v636 = vsel %vm613, %v630, %v584
      %v637 = vsel %vm613, %v631, %v586
      %v638 = vld [vmem:[%s3] sm:$0xff]
      %v639 = vld [vmem:[%s3 + $0x8] sm:$0xff]
      %v640 = vld [vmem:[%s3 + $0x10] sm:$0xff]
      %v641 = vld [vmem:[%s3 + $0x18] sm:$0xff]
      %v642 = vld [vmem:[%s3 + $0x20] sm:$0xff]
      %v643 = vld [vmem:[%s3 + $0x28] sm:$0xff]
      %v644 = vld [vmem:[%s3 + $0x30] sm:$0xff]
      %v645 = vld [vmem:[%s3 + $0x38] sm:$0xff]
      %v646 = vld [vmem:[%s3 + $0x40] sm:$0xff]
      %v647 = vld [vmem:[%s3 + $0x48] sm:$0xff]
      %v648 = vld [vmem:[%s3 + $0x50] sm:$0xff]
      %v649 = vld [vmem:[%s3 + $0x58] sm:$0xff]
      %v650 = vld [vmem:[%s3 + $0x60] sm:$0xff]
      %v651 = vld [vmem:[%s3 + $0x68] sm:$0xff]
      %v652 = vld [vmem:[%s3 + $0x70] sm:$0xff]
      %v653 = vld [vmem:[%s3 + $0x78] sm:$0xff]
      %v654 = vld [vmem:[%s3 + $0x80] sm:$0xff]
      %v655 = vld [vmem:[%s3 + $0x88] sm:$0xff]
      %v656 = vld [vmem:[%s3 + $0x90] sm:$0xff]
      %v657 = vld [vmem:[%s3 + $0x98] sm:$0xff]
      %v658 = vld [vmem:[%s3 + $0xa0] sm:$0xff]
      %v659 = vld [vmem:[%s3 + $0xa8] sm:$0xff]
      %v660 = vld [vmem:[%s3 + $0xb0] sm:$0xff]
      %v661 = vld [vmem:[%s3 + $0xb8] sm:$0xff]
      %v662 = vld [vmem:[%s3 + $0xc0] sm:$0xff]
      %v663 = vld [vmem:[%s3 + $0xc8] sm:$0xff]
      %v664 = vld [vmem:[%s3 + $0xd0] sm:$0xff]
      %v665 = vld [vmem:[%s3 + $0xd8] sm:$0xff]
      %v666 = vld [vmem:[%s3 + $0xe0] sm:$0xff]
      %v667 = vld [vmem:[%s3 + $0xe8] sm:$0xff]
      %v668 = vld [vmem:[%s3 + $0xf0] sm:$0xff]
      %v669 = vld [vmem:[%s3 + $0xf8] sm:$0xff]
      %v670 = vld [vmem:[%s3 + $0x100] sm:$0xff]
      %v671 = vld [vmem:[%s3 + $0x108] sm:$0xff]
      %v672 = vld [vmem:[%s3 + $0x110] sm:$0xff]
      %v673 = vld [vmem:[%s3 + $0x118] sm:$0xff]
      %v674 = vld [vmem:[%s4] sm:$0x1]
      %v676 = vlaneseq
      %v677 = vshrl.u32 %v676, 7
      %v678 = vsub.s32 0, %v677
      %v679 = vrot.slane %v674, %v678
      %v681 = vsel %vm599, %v525, 0
      %v683 = vsel %vm599, %v527, 0
      %v685 = vsel %vm599, %v529, 0
      %v687 = vsel %vm599, %v594, 0
      %v689 = vsel %vm599, %v596, 0
      %v691 = vsel %vm599, %v598, 0
      %693 = vmatprep.subr.mxu0 0.0
      %694 = vmatpush1.msra.mxu0 %v638
      %695 = vmatprep.subr.mxu0 0.0
      %696 = vmatpush1.msra.mxu0 %v639
      %697 = vmatprep.subr.mxu0 0.0
      %698 = vmatpush1.msra.mxu0 %v640
      %699 = vmatprep.subr.mxu0 0.0
      %700 = vmatpush1.msra.mxu0 %v641
      %701 = vmatprep.subr.mxu0 0.0
      %702 = vmatpush1.msra.mxu0 %v642
      %703 = vmatprep.subr.mxu0 0.0
      %704 = vmatpush1.msra.mxu0 %v643
      %705 = vmatprep.subr.mxu0 0.0
      %706 = vmatpush1.msra.mxu0 %v644
      %707 = vmatprep.subr.mxu0 0.0
      %708 = vmatpush1.msra.mxu0 %v645
      %709 = vmatprep.subr.mxu0 0.0
      %710 = vmatpush1.msra.mxu0 %v646
      %711 = vmatprep.subr.mxu0 0.0
      %712 = vmatpush1.msra.mxu0 %v647
      %713 = vmatprep.subr.mxu0 0.0
      %714 = vmatpush1.msra.mxu0 %v648
      %715 = vmatprep.subr.mxu0 0.0
      %716 = vmatpush1.msra.mxu0 %v649
      %717 = vmatprep.subr.mxu0 0.0
      %718 = vmatpush1.msra.mxu0 %v650
      %719 = vmatprep.subr.mxu0 0.0
      %720 = vmatpush1.msra.mxu0 %v651
      %721 = vmatprep.subr.mxu0 0.0
      %722 = vmatpush1.msra.mxu0 %v652
      %723 = vmatprep.subr.mxu0 0.0
      %724 = vmatpush1.msra.mxu0 %v653
      %725 = vmatprep.subr.mxu0 0.0
      %726 = vmatpush1.msra.mxu0 %v654
      %727 = vmatprep.subr.mxu0 0.0
      %728 = vmatpush1.msra.mxu0 %v655
      %729 = vmatprep.subr.mxu0 0.0
      %730 = vmatpush1.msra.mxu0 %v656
      %731 = vmatprep.subr.mxu0 0.0
      %732 = vmatpush1.msra.mxu0 %v657
      %733 = vmatprep.subr.mxu0 0.0
      %734 = vmatpush1.msra.mxu0 %v658
      %735 = vmatprep.subr.mxu0 0.0
      %736 = vmatpush1.msra.mxu0 %v659
      %737 = vmatprep.subr.mxu0 0.0
      %738 = vmatpush1.msra.mxu0 %v660
      %739 = vmatprep.subr.mxu0 0.0
      %740 = vmatpush1.msra.mxu0 %v661
      %741 = vmatprep.subr.mxu0 0.0
      %742 = vmatpush1.msra.mxu0 %v662
      %743 = vmatprep.subr.mxu0 0.0
      %744 = vmatpush1.msra.mxu0 %v663
      %745 = vmatprep.subr.mxu0 0.0
      %746 = vmatpush1.msra.mxu0 %v664
      %747 = vmatprep.subr.mxu0 0.0
      %748 = vmatpush1.msra.mxu0 %v665
      %749 = vmatprep.subr.mxu0 0.0
      %750 = vmatpush1.msra.mxu0 %v666
      %751 = vmatprep.subr.mxu0 0.0
      %752 = vmatpush1.msra.mxu0 %v667
      %753 = vmatprep.subr.mxu0 0.0
      %754 = vmatpush1.msra.mxu0 %v668
      %755 = vmatprep.subr.mxu0 0.0
      %756 = vmatpush1.msra.mxu0 %v669
      %757 = vmatprep.mubr.f32.mxu0 %v632
      %758 = vmatmul.mubr.f32.gmra.mrb[0].mxu0 %v614
      %v759 = vpop.f32.mrb[0].mxu0
      %v760 = vadd.f32 %v679, %v759
      %v761 = vpop.f32.mrb[0].mxu0
      %762 = vmatprep.mubr.f32.mxu0 %v633
      %763 = vmatmul.mubr.f32.gmra.mrb[0].mxu0 %v615
      %v764 = vpop.f32.mrb[0].mxu0
      %v765 = vadd.f32 %v679, %v764
      %v766 = vpop.f32.mrb[0].mxu0
      %767 = vmatprep.mubr.f32.mxu0 %v634
      %768 = vmatmul.mubr.f32.gmra.mrb[0].mxu0 %v616
      %v769 = vpop.f32.mrb[0].mxu0
      %v770 = vadd.f32 %v679, %v769
      %v771 = vpop.f32.mrb[0].mxu0
      %772 = vmatprep.mubr.f32.mxu0 %v635
      %773 = vmatmul.mubr.f32.gmra.mrb[0].mxu0 %v617
      %v774 = vpop.f32.mrb[0].mxu0
      %v775 = vadd.f32 %v679, %v774
      %v776 = vpop.f32.mrb[0].mxu0
      %777 = vmatprep.mubr.f32.mxu0 %v636
      %778 = vmatmul.mubr.f32.gmra.mrb[0].mxu0 %v618
      %v779 = vpop.f32.mrb[0].mxu0
      %v780 = vadd.f32 %v679, %v779
      %v781 = vpop.f32.mrb[0].mxu0
      %782 = vmatprep.mubr.f32.mxu0 %v637
      %783 = vmatmul.mubr.f32.gmra.mrb[0].mxu0 %v619
      %v784 = vpop.f32.mrb[0].mxu0
      %v785 = vadd.f32 %v679, %v784
      %v786 = vpop.f32.mrb[0].mxu0
      %787 = vdwg.mxu0
      %788 = vmatprep.subr.mxu0 0.0
      %789 = vmatpush1.msra.mxu0 %v670
      %790 = vmatprep.subr.mxu0 0.0
      %791 = vmatpush1.msra.mxu0 %v671
      %792 = vmatprep.subr.mxu0 0.0
      %793 = vmatpush1.msra.mxu0 %v672
      %794 = vmatprep.subr.mxu0 0.0
      %795 = vmatpush1.msra.mxu0 %v673
      %796 = vmatprep.subr.mxu0 0.0
      %797 = vmatpush1.msra.mxu0 0.0
      %798 = vmatprep.subr.mxu0 0.0
      %799 = vmatpush1.msra.mxu0 0.0
      %800 = vmatprep.subr.mxu0 0.0
      %801 = vmatpush1.msra.mxu0 0.0
      %802 = vmatprep.subr.mxu0 0.0
      %803 = vmatpush1.msra.mxu0 0.0
      %804 = vmatprep.subr.mxu0 0.0
      %805 = vmatpush1.msra.mxu0 0.0
      %806 = vmatprep.subr.mxu0 0.0
      %807 = vmatpush1.msra.mxu0 0.0
      %808 = vmatprep.subr.mxu0 0.0
      %809 = vmatpush1.msra.mxu0 0.0
      %810 = vmatprep.subr.mxu0 0.0
      %811 = vmatpush1.msra.mxu0 0.0
      %812 = vmatprep.subr.mxu0 0.0
      %813 = vmatpush1.msra.mxu0 0.0
      %814 = vmatprep.subr.mxu0 0.0
      %815 = vmatpush1.msra.mxu0 0.0
      %816 = vmatprep.subr.mxu0 0.0
      %817 = vmatpush1.msra.mxu0 0.0
      %818 = vmatprep.subr.mxu0 0.0
      %819 = vmatpush1.msra.mxu0 0.0
      %820 = vmatprep.subr.mxu0 0.0
      %821 = vmatpush1.msra.mxu0 0.0
      %822 = vmatprep.subr.mxu0 0.0
      %823 = vmatpush1.msra.mxu0 0.0
      %824 = vmatprep.subr.mxu0 0.0
      %825 = vmatpush1.msra.mxu0 0.0
      %826 = vmatprep.subr.mxu0 0.0
      %827 = vmatpush1.msra.mxu0 0.0
      %828 = vmatprep.subr.mxu0 0.0
      %829 = vmatpush1.msra.mxu0 0.0
      %830 = vmatprep.subr.mxu0 0.0
      %831 = vmatpush1.msra.mxu0 0.0
      %832 = vmatprep.subr.mxu0 0.0
      %833 = vmatpush1.msra.mxu0 0.0
      %834 = vmatprep.subr.mxu0 0.0
      %835 = vmatpush1.msra.mxu0 0.0
      %836 = vmatprep.subr.mxu0 0.0
      %837 = vmatpush1.msra.mxu0 0.0
      %838 = vmatprep.subr.mxu0 0.0
      %839 = vmatpush1.msra.mxu0 0.0
      %840 = vmatprep.subr.mxu0 0.0
      %841 = vmatpush1.msra.mxu0 0.0
      %842 = vmatprep.subr.mxu0 0.0
      %843 = vmatpush1.msra.mxu0 0.0
      %844 = vmatprep.subr.mxu0 0.0
      %845 = vmatpush1.msra.mxu0 0.0
      %846 = vmatprep.subr.mxu0 0.0
      %847 = vmatpush1.msra.mxu0 0.0
      %848 = vmatprep.subr.mxu0 0.0
      %849 = vmatpush1.msra.mxu0 0.0
      %850 = vmatprep.subr.mxu0 0.0
      %851 = vmatpush1.msra.mxu0 0.0
      %852 = vmatprep.mubr.f32.mxu0 0.0
      %853 = vmatmul.mubr.f32.gmra.mrb[0].mxu0 %v681
      %v854 = vpop.f32.mrb[0].mxu0
      %v855 = vadd.f32 %v760, %v854
      %v856 = vpop.f32.mrb[0].mxu0
      %857 = vmatprep.mubr.f32.mxu0 0.0
      %858 = vmatmul.mubr.f32.gmra.mrb[0].mxu0 %v683
      %v859 = vpop.f32.mrb[0].mxu0
      %v860 = vadd.f32 %v765, %v859
      %v861 = vpop.f32.mrb[0].mxu0
      %862 = vmatprep.mubr.f32.mxu0 0.0
      %863 = vmatmul.mubr.f32.gmra.mrb[0].mxu0 %v685
      %v864 = vpop.f32.mrb[0].mxu0
      %v865 = vadd.f32 %v770, %v864
      %v866 = vpop.f32.mrb[0].mxu0
      %867 = vmatprep.mubr.f32.mxu0 0.0
      %868 = vmatmul.mubr.f32.gmra.mrb[0].mxu0 %v687
      %v869 = vpop.f32.mrb[0].mxu0
      %v870 = vadd.f32 %v775, %v869
      %v871 = vpop.f32.mrb[0].mxu0
      %872 = vmatprep.mubr.f32.mxu0 0.0
      %873 = vmatmul.mubr.f32.gmra.mrb[0].mxu0 %v689
      %v874 = vpop.f32.mrb[0].mxu0
      %v875 = vadd.f32 %v780, %v874
      %v876 = vpop.f32.mrb[0].mxu0
      %877 = vmatprep.mubr.f32.mxu0 0.0
      %878 = vmatmul.mubr.f32.gmra.mrb[0].mxu0 %v691
      %v879 = vpop.f32.mrb[0].mxu0
      %v880 = vadd.f32 %v785, %v879
      %v881 = vpop.f32.mrb[0].mxu0
      %882 = vdwg.mxu0
      %v883 = vmax.f32 %v855, 0.0
      %v884 = vmax.f32 %v860, 0.0
      %v885 = vmax.f32 %v865, 0.0
      %v886 = vmax.f32 %v870, 0.0
      %v887 = vmax.f32 %v875, 0.0
      %v888 = vmax.f32 %v880, 0.0
      %v889 = vld [vmem:[%s5] sm:$0xff]
      %v890 = vld [vmem:[%s5 + $0x8] sm:$0xff]
      %v891 = vld [vmem:[%s5 + $0x10] sm:$0xff]
      %v892 = vld [vmem:[%s5 + $0x18] sm:$0xff]
      %v893 = vld [vmem:[%s6] sm:$0x1]
      %v895 = vlaneseq
      %v896 = vshrl.u32 %v895, 7
      %v897 = vsub.s32 0, %v896
      %v898 = vrot.slane %v893, %v897
      %v901 = vsel %vm599, %v883, 0
      %v904 = vsel %vm599, %v884, 0
      %v907 = vsel %vm599, %v885, 0
      %v910 = vsel %vm599, %v886, 0
      %v913 = vsel %vm599, %v887, 0
      %v916 = vsel %vm599, %v888, 0
      %918 = vmatprep.subr.mxu0 0.0
      %919 = vmatpush1.msra.mxu0 %v889
      %920 = vmatprep.subr.mxu0 0.0
      %921 = vmatpush1.msra.mxu0 %v890
      %922 = vmatprep.subr.mxu0 0.0
      %923 = vmatpush1.msra.mxu0 %v891
      %924 = vmatprep.subr.mxu0 0.0
      %925 = vmatpush1.msra.mxu0 %v892
      %926 = vmatprep.subr.mxu0 0.0
      %927 = vmatpush1.msra.mxu0 0.0
      %928 = vmatprep.subr.mxu0 0.0
      %929 = vmatpush1.msra.mxu0 0.0
      %930 = vmatprep.subr.mxu0 0.0
      %931 = vmatpush1.msra.mxu0 0.0
      %932 = vmatprep.subr.mxu0 0.0
      %933 = vmatpush1.msra.mxu0 0.0
      %934 = vmatprep.subr.mxu0 0.0
      %935 = vmatpush1.msra.mxu0 0.0
      %936 = vmatprep.subr.mxu0 0.0
      %937 = vmatpush1.msra.mxu0 0.0
      %938 = vmatprep.subr.mxu0 0.0
      %939 = vmatpush1.msra.mxu0 0.0
      %940 = vmatprep.subr.mxu0 0.0
      %941 = vmatpush1.msra.mxu0 0.0
      %942 = vmatprep.subr.mxu0 0.0
      %943 = vmatpush1.msra.mxu0 0.0
      %944 = vmatprep.subr.mxu0 0.0
      %945 = vmatpush1.msra.mxu0 0.0
      %946 = vmatprep.subr.mxu0 0.0
      %947 = vmatpush1.msra.mxu0 0.0
      %948 = vmatprep.subr.mxu0 0.0
      %949 = vmatpush1.msra.mxu0 0.0
      %950 = vmatprep.subr.mxu0 0.0
      %951 = vmatpush1.msra.mxu0 0.0
      %952 = vmatprep.subr.mxu0 0.0
      %953 = vmatpush1.msra.mxu0 0.0
      %954 = vmatprep.subr.mxu0 0.0
      %955 = vmatpush1.msra.mxu0 0.0
      %956 = vmatprep.subr.mxu0 0.0
      %957 = vmatpush1.msra.mxu0 0.0
      %958 = vmatprep.subr.mxu0 0.0
      %959 = vmatpush1.msra.mxu0 0.0
      %960 = vmatprep.subr.mxu0 0.0
      %961 = vmatpush1.msra.mxu0 0.0
      %962 = vmatprep.subr.mxu0 0.0
      %963 = vmatpush1.msra.mxu0 0.0
      %964 = vmatprep.subr.mxu0 0.0
      %965 = vmatpush1.msra.mxu0 0.0
      %966 = vmatprep.subr.mxu0 0.0
      %967 = vmatpush1.msra.mxu0 0.0
      %968 = vmatprep.subr.mxu0 0.0
      %969 = vmatpush1.msra.mxu0 0.0
      %970 = vmatprep.subr.mxu0 0.0
      %971 = vmatpush1.msra.mxu0 0.0
      %972 = vmatprep.subr.mxu0 0.0
      %973 = vmatpush1.msra.mxu0 0.0
      %974 = vmatprep.subr.mxu0 0.0
      %975 = vmatpush1.msra.mxu0 0.0
      %976 = vmatprep.subr.mxu0 0.0
      %977 = vmatpush1.msra.mxu0 0.0
      %978 = vmatprep.subr.mxu0 0.0
      %979 = vmatpush1.msra.mxu0 0.0
      %980 = vmatprep.subr.mxu0 0.0
      %981 = vmatpush1.msra.mxu0 0.0
      %982 = vmatprep.mubr.f32.mxu0 0.0
      %983 = vmatmul.mubr.f32.gmra.mrb[0].mxu0 %v901
      %v984 = vpop.f32.mrb[0].mxu0
      %v985 = vadd.f32 %v898, %v984
      %v986 = vpop.f32.mrb[0].mxu0
      %987 = vmatprep.mubr.f32.mxu0 0.0
      %988 = vmatmul.mubr.f32.gmra.mrb[0].mxu0 %v904
      %v989 = vpop.f32.mrb[0].mxu0
      %v990 = vadd.f32 %v898, %v989
      %v991 = vpop.f32.mrb[0].mxu0
      %992 = vmatprep.mubr.f32.mxu0 0.0
      %993 = vmatmul.mubr.f32.gmra.mrb[0].mxu0 %v907
      %v994 = vpop.f32.mrb[0].mxu0
      %v995 = vadd.f32 %v898, %v994
      %v996 = vpop.f32.mrb[0].mxu0
      %997 = vmatprep.mubr.f32.mxu0 0.0
      %998 = vmatmul.mubr.f32.gmra.mrb[0].mxu0 %v910
      %v999 = vpop.f32.mrb[0].mxu0
      %v1000 = vadd.f32 %v898, %v999
      %v1001 = vpop.f32.mrb[0].mxu0
      %1002 = vmatprep.mubr.f32.mxu0 0.0
      %1003 = vmatmul.mubr.f32.gmra.mrb[0].mxu0 %v913
      %v1004 = vpop.f32.mrb[0].mxu0
      %v1005 = vadd.f32 %v898, %v1004
      %v1006 = vpop.f32.mrb[0].mxu0
      %1007 = vmatprep.mubr.f32.mxu0 0.0
      %1008 = vmatmul.mubr.f32.gmra.mrb[0].mxu0 %v916
      %v1009 = vpop.f32.mrb[0].mxu0
      %v1010 = vadd.f32 %v898, %v1009
      %v1011 = vpop.f32.mrb[0].mxu0
      %1012 = vdwg.mxu0
      %v1013 = vmin.f32 %v985, 4.1351666
      %v1014 = vmin.f32 %v990, 4.1351666
      %v1015 = vmin.f32 %v995, 4.1351666
      %v1016 = vmin.f32 %v1000, 4.1351666
      %v1017 = vmin.f32 %v1005, 4.1351666
      %v1018 = vmin.f32 %v1010, 4.1351666
      %v1019 = vld [vmem:[%s7] sm:$0x1]
      %v1020 = vld [vmem:[%s7 + $0x1] sm:$0x1]
      %v1021 = vld [vmem:[%s7 + $0x2] sm:$0x1]
      %v1022 = vld [vmem:[%s7 + $0x3] sm:$0x1]
      %v1023 = vld [vmem:[%s8] sm:$0xff]
      %v1024 = vld [vmem:[%s8 + $0x8] sm:$0xff]
      %v1025 = vld [vmem:[%s8 + $0x10] sm:$0xff]
      %v1026 = vld [vmem:[%s8 + $0x18] sm:$0xff]
      %v1027 = vld [vmem:[%s8 + $0x20] sm:$0xff]
      %v1028 = vld [vmem:[%s8 + $0x28] sm:$0xff]
      %s1029 = smul.u32 %s20, 2
      %s1030 = scvt.s32.f32 %s1029
      %s1031 = smul.f32 %s1030, 4.0
      %v1032 = vstv %s1031
      %v1033 = vadd.f32 %v1023, %v1032
      %v1034 = vadd.f32 %v1024, %v1032
      %v1035 = vadd.f32 %v1025, %v1032
      %v1036 = vadd.f32 %v1026, %v1032
      %v1037 = vadd.f32 %v1027, %v1032
      %v1038 = vadd.f32 %v1028, %v1032
      %1040 = vset.pattern.permute.xlu0 0
      %1041 = vperm.xlu0 %1040, %v1023
      %v1042 = vpop.permute.xlu0 %1041
      %1045 = vset.pattern.permute.xlu0 0
      %1046 = vperm.xlu0 %1045, %v1024
      %v1047 = vpop.permute.xlu0 %1046
      %1050 = vset.pattern.permute.xlu0 0
      %1051 = vperm.xlu0 %1050, %v1025
      %v1052 = vpop.permute.xlu0 %1051
      %1055 = vset.pattern.permute.xlu0 0
      %1056 = vperm.xlu0 %1055, %v1026
      %v1057 = vpop.permute.xlu0 %1056
      %1060 = vset.pattern.permute.xlu0 0
      %1061 = vperm.xlu0 %1060, %v1027
      %v1062 = vpop.permute.xlu0 %1061
      %1065 = vset.pattern.permute.xlu0 0
      %1066 = vperm.xlu0 %1065, %v1028
      %v1067 = vpop.permute.xlu0 %1066
      %v1069 = vlaneseq
      %v1070 = vshrl.u32 %v1069, 7
      %v1071 = vsub.s32 0, %v1070
      %v1072 = vrot.slane %v1021, %v1071
      %v1073 = vadd.f32 %v1042, %v1072
      %v1074 = vadd.f32 %v1047, %v1072
      %v1075 = vadd.f32 %v1052, %v1072
      %v1076 = vadd.f32 %v1057, %v1072
      %v1077 = vadd.f32 %v1062, %v1072
      %v1078 = vadd.f32 %v1067, %v1072
      %1080 = vset.pattern.permute.xlu0 1
      %1081 = vperm.xlu0 %1080, %v1033
      %v1082 = vpop.permute.xlu0 %1081
      %1085 = vset.pattern.permute.xlu0 1
      %1086 = vperm.xlu0 %1085, %v1034
      %v1087 = vpop.permute.xlu0 %1086
      %1090 = vset.pattern.permute.xlu0 1
      %1091 = vperm.xlu0 %1090, %v1035
      %v1092 = vpop.permute.xlu0 %1091
      %1095 = vset.pattern.permute.xlu0 1
      %1096 = vperm.xlu0 %1095, %v1036
      %v1097 = vpop.permute.xlu0 %1096
      %1100 = vset.pattern.permute.xlu0 1
      %1101 = vperm.xlu0 %1100, %v1037
      %v1102 = vpop.permute.xlu0 %1101
      %1105 = vset.pattern.permute.xlu0 1
      %1106 = vperm.xlu0 %1105, %v1038
      %v1107 = vpop.permute.xlu0 %1106
      %v1109 = vlaneseq
      %v1110 = vshrl.u32 %v1109, 7
      %v1111 = vsub.s32 0, %v1110
      %v1112 = vrot.slane %v1022, %v1111
      %v1113 = vadd.f32 %v1082, %v1112
      %v1114 = vadd.f32 %v1087, %v1112
      %v1115 = vadd.f32 %v1092, %v1112
      %v1116 = vadd.f32 %v1097, %v1112
      %v1117 = vadd.f32 %v1102, %v1112
      %v1118 = vadd.f32 %v1107, %v1112
      %v1119 = vlaneseq
      %v1120 = vshrl.u32 %v1119, 7
      %v1121 = vsub.s32 0, %v1120
      %v1122 = vrot.slane %v1019, %v1121
      %1124 = vrot.lane.b32.xlu0 %v1122, 6
      %v1125 = vpop.permute.xlu0 %1124
      %v1127 = vmul.f32 %v985, %v1125
      %v1128 = vmul.f32 %v990, %v1125
      %v1129 = vmul.f32 %v995, %v1125
      %v1130 = vmul.f32 %v1000, %v1125
      %v1131 = vmul.f32 %v1005, %v1125
      %v1132 = vmul.f32 %v1010, %v1125
      %1139 = vrot.lane.b32.xlu0 %v1073, 6
      %v1140 = vpop.permute.xlu0 %1139
      %1141 = vrot.lane.b32.xlu0 %v1074, 6
      %v1142 = vpop.permute.xlu0 %1141
      %1143 = vrot.lane.b32.xlu0 %v1075, 6
      %v1144 = vpop.permute.xlu0 %1143
      %1145 = vrot.lane.b32.xlu0 %v1076, 6
      %v1146 = vpop.permute.xlu0 %1145
      %1147 = vrot.lane.b32.xlu0 %v1077, 6
      %v1148 = vpop.permute.xlu0 %1147
      %1149 = vrot.lane.b32.xlu0 %v1078, 6
      %v1150 = vpop.permute.xlu0 %1149
      %v1157 = vadd.f32 %v1127, %v1140
      %v1158 = vadd.f32 %v1128, %v1142
      %v1159 = vadd.f32 %v1129, %v1144
      %v1160 = vadd.f32 %v1130, %v1146
      %v1161 = vadd.f32 %v1131, %v1148
      %v1162 = vadd.f32 %v1132, %v1150
      %v1163 = vlaneseq
      %v1164 = vshrl.u32 %v1163, 7
      %v1165 = vsub.s32 0, %v1164
      %v1166 = vrot.slane %v1020, %v1165
      %1168 = vrot.lane.b32.xlu0 %v1166, 12
      %v1169 = vpop.permute.xlu0 %1168
      %v1171 = vmul.f32 %v985, %v1169
      %v1172 = vmul.f32 %v990, %v1169
      %v1173 = vmul.f32 %v995, %v1169
      %v1174 = vmul.f32 %v1000, %v1169
      %v1175 = vmul.f32 %v1005, %v1169
      %v1176 = vmul.f32 %v1010, %v1169
      %1183 = vrot.lane.b32.xlu0 %v1113, 12
      %v1184 = vpop.permute.xlu0 %1183
      %1185 = vrot.lane.b32.xlu0 %v1114, 12
      %v1186 = vpop.permute.xlu0 %1185
      %1187 = vrot.lane.b32.xlu0 %v1115, 12
      %v1188 = vpop.permute.xlu0 %1187
      %1189 = vrot.lane.b32.xlu0 %v1116, 12
      %v1190 = vpop.permute.xlu0 %1189
      %1191 = vrot.lane.b32.xlu0 %v1117, 12
      %v1192 = vpop.permute.xlu0 %1191
      %1193 = vrot.lane.b32.xlu0 %v1118, 12
      %v1194 = vpop.permute.xlu0 %1193
      %v1201 = vadd.f32 %v1171, %v1184
      %v1202 = vadd.f32 %v1172, %v1186
      %v1203 = vadd.f32 %v1173, %v1188
      %v1204 = vadd.f32 %v1174, %v1190
      %v1205 = vadd.f32 %v1175, %v1192
      %v1206 = vadd.f32 %v1176, %v1194
      %v1207 = vmul.f32 %v1013, 1.442695
      %v1208 = vpow.pop %v1207
      %v1209 = vmul.f32 %v1014, 1.442695
      %v1210 = vpow.pop %v1209
      %v1211 = vmul.f32 %v1015, 1.442695
      %v1212 = vpow.pop %v1211
      %v1213 = vmul.f32 %v1016, 1.442695
      %v1214 = vpow.pop %v1213
      %v1215 = vmul.f32 %v1017, 1.442695
      %v1216 = vpow.pop %v1215
      %v1217 = vmul.f32 %v1018, 1.442695
      %v1218 = vpow.pop %v1217
      %1219 = vrot.lane.b32.xlu0 %v1122, 18
      %v1220 = vpop.permute.xlu0 %1219
      %v1222 = vmul.f32 %v1208, %v1220
      %v1223 = vmul.f32 %v1210, %v1220
      %v1224 = vmul.f32 %v1212, %v1220
      %v1225 = vmul.f32 %v1214, %v1220
      %v1226 = vmul.f32 %v1216, %v1220
      %v1227 = vmul.f32 %v1218, %v1220
      %1228 = vrot.lane.b32.xlu0 %v1166, 24
      %v1229 = vpop.permute.xlu0 %1228
      %v1231 = vmul.f32 %v1208, %v1229
      %v1232 = vmul.f32 %v1210, %v1229
      %v1233 = vmul.f32 %v1212, %v1229
      %v1234 = vmul.f32 %v1214, %v1229
      %v1235 = vmul.f32 %v1216, %v1229
      %v1236 = vmul.f32 %v1218, %v1229
      %v1237 = vmul.f32 %v1222, 0.5
      %v1238 = vmul.f32 %v1223, 0.5
      %v1239 = vmul.f32 %v1224, 0.5
      %v1240 = vmul.f32 %v1225, 0.5
      %v1241 = vmul.f32 %v1226, 0.5
      %v1242 = vmul.f32 %v1227, 0.5
      %1249 = vrot.lane.b32.xlu0 %v1237, 116
      %v1250 = vpop.permute.xlu0 %1249
      %1251 = vrot.lane.b32.xlu0 %v1238, 116
      %v1252 = vpop.permute.xlu0 %1251
      %1253 = vrot.lane.b32.xlu0 %v1239, 116
      %v1254 = vpop.permute.xlu0 %1253
      %1255 = vrot.lane.b32.xlu0 %v1240, 116
      %v1256 = vpop.permute.xlu0 %1255
      %1257 = vrot.lane.b32.xlu0 %v1241, 116
      %v1258 = vpop.permute.xlu0 %1257
      %1259 = vrot.lane.b32.xlu0 %v1242, 116
      %v1260 = vpop.permute.xlu0 %1259
      %v1267 = vsub.f32 %v1157, %v1250
      %v1268 = vsub.f32 %v1158, %v1252
      %v1269 = vsub.f32 %v1159, %v1254
      %v1270 = vsub.f32 %v1160, %v1256
      %v1271 = vsub.f32 %v1161, %v1258
      %v1272 = vsub.f32 %v1162, %v1260
      %v1273 = vmax.f32 %v1267, 0.0
      %v1274 = vmax.f32 %v1268, 0.0
      %v1275 = vmax.f32 %v1269, 0.0
      %v1276 = vmax.f32 %v1270, 0.0
      %v1277 = vmax.f32 %v1271, 0.0
      %v1278 = vmax.f32 %v1272, 0.0
      %v1279 = vmin.f32 %v1273, 64.0
      %v1280 = vmin.f32 %v1274, 64.0
      %v1281 = vmin.f32 %v1275, 64.0
      %v1282 = vmin.f32 %v1276, 64.0
      %v1283 = vmin.f32 %v1277, 64.0
      %v1284 = vmin.f32 %v1278, 64.0
      %v1285 = vmul.f32 %v1231, 0.5
      %v1286 = vmul.f32 %v1232, 0.5
      %v1287 = vmul.f32 %v1233, 0.5
      %v1288 = vmul.f32 %v1234, 0.5
      %v1289 = vmul.f32 %v1235, 0.5
      %v1290 = vmul.f32 %v1236, 0.5
      %1297 = vrot.lane.b32.xlu0 %v1285, 116
      %v1298 = vpop.permute.xlu0 %1297
      %1299 = vrot.lane.b32.xlu0 %v1286, 116
      %v1300 = vpop.permute.xlu0 %1299
      %1301 = vrot.lane.b32.xlu0 %v1287, 116
      %v1302 = vpop.permute.xlu0 %1301
      %1303 = vrot.lane.b32.xlu0 %v1288, 116
      %v1304 = vpop.permute.xlu0 %1303
      %1305 = vrot.lane.b32.xlu0 %v1289, 116
      %v1306 = vpop.permute.xlu0 %1305
      %1307 = vrot.lane.b32.xlu0 %v1290, 116
      %v1308 = vpop.permute.xlu0 %1307
      %v1315 = vsub.f32 %v1201, %v1298
      %v1316 = vsub.f32 %v1202, %v1300
      %v1317 = vsub.f32 %v1203, %v1302
      %v1318 = vsub.f32 %v1204, %v1304
      %v1319 = vsub.f32 %v1205, %v1306
      %v1320 = vsub.f32 %v1206, %v1308
      %v1321 = vmax.f32 %v1315, 0.0
      %v1322 = vmax.f32 %v1316, 0.0
      %v1323 = vmax.f32 %v1317, 0.0
      %v1324 = vmax.f32 %v1318, 0.0
      %v1325 = vmax.f32 %v1319, 0.0
      %v1326 = vmax.f32 %v1320, 0.0
      %v1327 = vmin.f32 %v1321, 64.0
      %v1328 = vmin.f32 %v1322, 64.0
      %v1329 = vmin.f32 %v1323, 64.0
      %v1330 = vmin.f32 %v1324, 64.0
      %v1331 = vmin.f32 %v1325, 64.0
      %v1332 = vmin.f32 %v1326, 64.0
      %v1333 = vadd.f32 %v1157, %v1250
      %v1334 = vadd.f32 %v1158, %v1252
      %v1335 = vadd.f32 %v1159, %v1254
      %v1336 = vadd.f32 %v1160, %v1256
      %v1337 = vadd.f32 %v1161, %v1258
      %v1338 = vadd.f32 %v1162, %v1260
      %v1339 = vmax.f32 %v1333, 0.0
      %v1340 = vmax.f32 %v1334, 0.0
      %v1341 = vmax.f32 %v1335, 0.0
      %v1342 = vmax.f32 %v1336, 0.0
      %v1343 = vmax.f32 %v1337, 0.0
      %v1344 = vmax.f32 %v1338, 0.0
      %v1345 = vmin.f32 %v1339, 64.0
      %v1346 = vmin.f32 %v1340, 64.0
      %v1347 = vmin.f32 %v1341, 64.0
      %v1348 = vmin.f32 %v1342, 64.0
      %v1349 = vmin.f32 %v1343, 64.0
      %v1350 = vmin.f32 %v1344, 64.0
      %v1351 = vadd.f32 %v1201, %v1298
      %v1352 = vadd.f32 %v1202, %v1300
      %v1353 = vadd.f32 %v1203, %v1302
      %v1354 = vadd.f32 %v1204, %v1304
      %v1355 = vadd.f32 %v1205, %v1306
      %v1356 = vadd.f32 %v1206, %v1308
      %v1357 = vmax.f32 %v1351, 0.0
      %v1358 = vmax.f32 %v1352, 0.0
      %v1359 = vmax.f32 %v1353, 0.0
      %v1360 = vmax.f32 %v1354, 0.0
      %v1361 = vmax.f32 %v1355, 0.0
      %v1362 = vmax.f32 %v1356, 0.0
      %v1363 = vmin.f32 %v1357, 64.0
      %v1364 = vmin.f32 %v1358, 64.0
      %v1365 = vmin.f32 %v1359, 64.0
      %v1366 = vmin.f32 %v1360, 64.0
      %v1367 = vmin.f32 %v1361, 64.0
      %v1368 = vmin.f32 %v1362, 64.0
      %v1369 = vsub.f32 0.0, %v985
      %v1370 = vsub.f32 0.0, %v990
      %v1371 = vsub.f32 0.0, %v995
      %v1372 = vsub.f32 0.0, %v1000
      %v1373 = vsub.f32 0.0, %v1005
      %v1374 = vsub.f32 0.0, %v1010
      %v1375 = vmul.f32 %v1369, 1.442695
      %v1376 = vpow.pop %v1375
      %v1377 = vmul.f32 %v1370, 1.442695
      %v1378 = vpow.pop %v1377
      %v1379 = vmul.f32 %v1371, 1.442695
      %v1380 = vpow.pop %v1379
      %v1381 = vmul.f32 %v1372, 1.442695
      %v1382 = vpow.pop %v1381
      %v1383 = vmul.f32 %v1373, 1.442695
      %v1384 = vpow.pop %v1383
      %v1385 = vmul.f32 %v1374, 1.442695
      %v1386 = vpow.pop %v1385
      %v1387 = vadd.f32 %v1376, 1.0
      %v1388 = vadd.f32 %v1378, 1.0
      %v1389 = vadd.f32 %v1380, 1.0
      %v1390 = vadd.f32 %v1382, 1.0
      %v1391 = vadd.f32 %v1384, 1.0
      %v1392 = vadd.f32 %v1386, 1.0
      %v1393 = vrcp.pop %v1387
      %v1394 = vmul.f32 1.0, %v1393
      %v1395 = vrcp.pop %v1388
      %v1396 = vmul.f32 1.0, %v1395
      %v1397 = vrcp.pop %v1389
      %v1398 = vmul.f32 1.0, %v1397
      %v1399 = vrcp.pop %v1390
      %v1400 = vmul.f32 1.0, %v1399
      %v1401 = vrcp.pop %v1391
      %v1402 = vmul.f32 1.0, %v1401
      %v1403 = vrcp.pop %v1392
      %v1404 = vmul.f32 1.0, %v1403
      %v1405 = vsub.f32 %v1345, %v1279
      %v1406 = vsub.f32 %v1346, %v1280
      %v1407 = vsub.f32 %v1347, %v1281
      %v1408 = vsub.f32 %v1348, %v1282
      %v1409 = vsub.f32 %v1349, %v1283
      %v1410 = vsub.f32 %v1350, %v1284
      %vm1411 = vcmp.ge.f32.partialorder %v1405, 16.0
      %vm1412 = vcmp.ge.f32.partialorder %v1406, 16.0
      %vm1413 = vcmp.ge.f32.partialorder %v1407, 16.0
      %vm1414 = vcmp.ge.f32.partialorder %v1408, 16.0
      %vm1415 = vcmp.ge.f32.partialorder %v1409, 16.0
      %vm1416 = vcmp.ge.f32.partialorder %v1410, 16.0
      %v1417 = vsub.f32 %v1363, %v1327
      %v1418 = vsub.f32 %v1364, %v1328
      %v1419 = vsub.f32 %v1365, %v1329
      %v1420 = vsub.f32 %v1366, %v1330
      %v1421 = vsub.f32 %v1367, %v1331
      %v1422 = vsub.f32 %v1368, %v1332
      %vm1423 = vcmp.ge.f32.partialorder %v1417, 16.0
      %vm1424 = vcmp.ge.f32.partialorder %v1418, 16.0
      %vm1425 = vcmp.ge.f32.partialorder %v1419, 16.0
      %vm1426 = vcmp.ge.f32.partialorder %v1420, 16.0
      %vm1427 = vcmp.ge.f32.partialorder %v1421, 16.0
      %vm1428 = vcmp.ge.f32.partialorder %v1422, 16.0
      %v1429 = vsel %vm1423, 1, 0
      %v1430 = vsel %vm1424, 1, 0
      %v1431 = vsel %vm1425, 1, 0
      %v1432 = vsel %vm1426, 1, 0
      %v1433 = vsel %vm1427, 1, 0
      %v1434 = vsel %vm1428, 1, 0
      %1435 = vrot.lane.b32.xlu0 %v1429, 122
      %v1436 = vpop.permute.xlu0 %1435
      %1437 = vrot.lane.b32.xlu0 %v1430, 122
      %v1438 = vpop.permute.xlu0 %1437
      %1439 = vrot.lane.b32.xlu0 %v1431, 122
      %v1440 = vpop.permute.xlu0 %1439
      %1441 = vrot.lane.b32.xlu0 %v1432, 122
      %v1442 = vpop.permute.xlu0 %1441
      %1443 = vrot.lane.b32.xlu0 %v1433, 122
      %v1444 = vpop.permute.xlu0 %1443
      %1445 = vrot.lane.b32.xlu0 %v1434, 122
      %v1446 = vpop.permute.xlu0 %1445
      %vm1447 = vcmp.ne.s32.totalorder %v1436, 0
      %vm1448 = vcmp.ne.s32.totalorder %v1438, 0
      %vm1449 = vcmp.ne.s32.totalorder %v1440, 0
      %vm1450 = vcmp.ne.s32.totalorder %v1442, 0
      %vm1451 = vcmp.ne.s32.totalorder %v1444, 0
      %vm1452 = vcmp.ne.s32.totalorder %v1446, 0
      %vm1453 = vmand %vm1411, %vm1447
      %vm1454 = vmand %vm1412, %vm1448
      %vm1455 = vmand %vm1413, %vm1449
      %vm1456 = vmand %vm1414, %vm1450
      %vm1457 = vmand %vm1415, %vm1451
      %vm1458 = vmand %vm1416, %vm1452
      %v1459 = vsel %vm1453, 1.0, 0.0
      %v1460 = vsel %vm1454, 1.0, 0.0
      %v1461 = vsel %vm1455, 1.0, 0.0
      %v1462 = vsel %vm1456, 1.0, 0.0
      %v1463 = vsel %vm1457, 1.0, 0.0
      %v1464 = vsel %vm1458, 1.0, 0.0
      %1471 = vrot.lane.b32.xlu0 %v1279, 122
      %v1472 = vpop.permute.xlu0 %1471
      %1473 = vrot.lane.b32.xlu0 %v1280, 122
      %v1474 = vpop.permute.xlu0 %1473
      %1475 = vrot.lane.b32.xlu0 %v1281, 122
      %v1476 = vpop.permute.xlu0 %1475
      %1477 = vrot.lane.b32.xlu0 %v1282, 122
      %v1478 = vpop.permute.xlu0 %1477
      %1479 = vrot.lane.b32.xlu0 %v1283, 122
      %v1480 = vpop.permute.xlu0 %1479
      %1481 = vrot.lane.b32.xlu0 %v1284, 122
      %v1482 = vpop.permute.xlu0 %1481
      %1495 = vrot.lane.b32.xlu0 %v1327, 122
      %v1496 = vpop.permute.xlu0 %1495
      %1497 = vrot.lane.b32.xlu0 %v1328, 122
      %v1498 = vpop.permute.xlu0 %1497
      %1499 = vrot.lane.b32.xlu0 %v1329, 122
      %v1500 = vpop.permute.xlu0 %1499
      %1501 = vrot.lane.b32.xlu0 %v1330, 122
      %v1502 = vpop.permute.xlu0 %1501
      %1503 = vrot.lane.b32.xlu0 %v1331, 122
      %v1504 = vpop.permute.xlu0 %1503
      %1505 = vrot.lane.b32.xlu0 %v1332, 122
      %v1506 = vpop.permute.xlu0 %1505
      %1519 = vrot.lane.b32.xlu0 %v1345, 6
      %v1520 = vpop.permute.xlu0 %1519
      %1521 = vrot.lane.b32.xlu0 %v1346, 6
      %v1522 = vpop.permute.xlu0 %1521
      %1523 = vrot.lane.b32.xlu0 %v1347, 6
      %v1524 = vpop.permute.xlu0 %1523
      %1525 = vrot.lane.b32.xlu0 %v1348, 6
      %v1526 = vpop.permute.xlu0 %1525
      %1527 = vrot.lane.b32.xlu0 %v1349, 6
      %v1528 = vpop.permute.xlu0 %1527
      %1529 = vrot.lane.b32.xlu0 %v1350, 6
      %v1530 = vpop.permute.xlu0 %1529
      %1543 = vrot.lane.b32.xlu0 %v1363, 6
      %v1544 = vpop.permute.xlu0 %1543
      %1545 = vrot.lane.b32.xlu0 %v1364, 6
      %v1546 = vpop.permute.xlu0 %1545
      %1547 = vrot.lane.b32.xlu0 %v1365, 6
      %v1548 = vpop.permute.xlu0 %1547
      %1549 = vrot.lane.b32.xlu0 %v1366, 6
      %v1550 = vpop.permute.xlu0 %1549
      %1551 = vrot.lane.b32.xlu0 %v1367, 6
      %v1552 = vpop.permute.xlu0 %1551
      %1553 = vrot.lane.b32.xlu0 %v1368, 6
      %v1554 = vpop.permute.xlu0 %1553
      %1567 = vrot.lane.b32.xlu0 %v1394, 24
      %v1568 = vpop.permute.xlu0 %1567
      %1569 = vrot.lane.b32.xlu0 %v1396, 24
      %v1570 = vpop.permute.xlu0 %1569
      %1571 = vrot.lane.b32.xlu0 %v1398, 24
      %v1572 = vpop.permute.xlu0 %1571
      %1573 = vrot.lane.b32.xlu0 %v1400, 24
      %v1574 = vpop.permute.xlu0 %1573
      %1575 = vrot.lane.b32.xlu0 %v1402, 24
      %v1576 = vpop.permute.xlu0 %1575
      %1577 = vrot.lane.b32.xlu0 %v1404, 24
      %v1578 = vpop.permute.xlu0 %1577
      %1591 = vrot.lane.b32.xlu0 %v1459, 24
      %v1592 = vpop.permute.xlu0 %1591
      %1593 = vrot.lane.b32.xlu0 %v1460, 24
      %v1594 = vpop.permute.xlu0 %1593
      %1595 = vrot.lane.b32.xlu0 %v1461, 24
      %v1596 = vpop.permute.xlu0 %1595
      %1597 = vrot.lane.b32.xlu0 %v1462, 24
      %v1598 = vpop.permute.xlu0 %1597
      %1599 = vrot.lane.b32.xlu0 %v1463, 24
      %v1600 = vpop.permute.xlu0 %1599
      %1601 = vrot.lane.b32.xlu0 %v1464, 24
      %v1602 = vpop.permute.xlu0 %1601
      %vm1609 = vcmask 48128
      %v1610 = vsel %vm1609, %v1472, %v1496
      %v1611 = vsel %vm1609, %v1474, %v1498
      %v1612 = vsel %vm1609, %v1476, %v1500
      %v1613 = vsel %vm1609, %v1478, %v1502
      %v1614 = vsel %vm1609, %v1480, %v1504
      %v1615 = vsel %vm1609, %v1482, %v1506
      %vm1616 = vcmask 97280
      %v1617 = vsel %vm1616, %v1610, %v1520
      %v1618 = vsel %vm1616, %v1611, %v1522
      %v1619 = vsel %vm1616, %v1612, %v1524
      %v1620 = vsel %vm1616, %v1613, %v1526
      %v1621 = vsel %vm1616, %v1614, %v1528
      %v1622 = vsel %vm1616, %v1615, %v1530
      %vm1623 = vcmask 146432
      %v1624 = vsel %vm1623, %v1617, %v1544
      %v1625 = vsel %vm1623, %v1618, %v1546
      %v1626 = vsel %vm1623, %v1619, %v1548
      %v1627 = vsel %vm1623, %v1620, %v1550
      %v1628 = vsel %vm1623, %v1621, %v1552
      %v1629 = vsel %vm1623, %v1622, %v1554
      %vm1630 = vcmask 195584
      %v1631 = vsel %vm1630, %v1624, %v1568
      %v1632 = vsel %vm1630, %v1625, %v1570
      %v1633 = vsel %vm1630, %v1626, %v1572
      %v1634 = vsel %vm1630, %v1627, %v1574
      %v1635 = vsel %vm1630, %v1628, %v1576
      %v1636 = vsel %vm1630, %v1629, %v1578
      %vm1637 = vcmask 244736
      %v1638 = vsel %vm1637, %v1631, %v1592
      %v1639 = vsel %vm1637, %v1632, %v1594
      %v1640 = vsel %vm1637, %v1633, %v1596
      %v1641 = vsel %vm1637, %v1634, %v1598
      %v1642 = vsel %vm1637, %v1635, %v1600
      %v1643 = vsel %vm1637, %v1636, %v1602
      %vm1644 = vcmask 293888
      %1645 = vst.msk [vmem:[%s406] sm:$0xff] %vm1644, %v1638
      %1646 = vst.msk [vmem:[%s406 + $0x8] sm:$0xff] %vm1644, %v1639
      %1647 = vst.msk [vmem:[%s406 + $0x10] sm:$0xff] %vm1644, %v1640
      %1648 = vst.msk [vmem:[%s406 + $0x18] sm:$0xff] %vm1644, %v1641
      %1649 = vst.msk [vmem:[%s406 + $0x20] sm:$0xff] %vm1644, %v1642
      %1650 = vst.msk [vmem:[%s406 + $0x28] sm:$0xff] %vm1644, %v1643
      %s1651 = smul.u32 6, %s20
      %p1652 = scmp.lt.s32.totalorder %s1651, 47
      %s1653 = scalar_select %p1652, %s1651, 47
      %s1654 = smul.addr %s1653, 8
      %s1655 = scalar_lea.vmem %s9, %s1654
      // Predicated region
      $region57: #{tpu_custom_call.1} parent=55 // pred_check
        %p1656 = pneg %p250
      $region58: #{tpu_custom_call.1} parent=55 // pred_check_branch
        %1658 = sbr.rel (%p1656) target = $region60
      $region59: #{tpu_custom_call.1} parent=55 // pred_region
        %s1659 = smul.u32 6, %s20
      $region60: #{tpu_custom_call.1} parent=55 // pred_fallthru
        _
    $region56: #{tpu_custom_call.1} parent=5 // pred_fallthru
      _
    %p1660 = scmp.le.s32.totalorder 2, %s15
    // Predicated region
    $region61: #{tpu_custom_call.1} parent=5 // pred_check
      %p1661 = pneg %p1660
    $region62: #{tpu_custom_call.1} parent=5 // pred_check_branch
      %1663 = sbr.rel (%p1661) target = $region64
    $region63: #{tpu_custom_call.1} parent=5 // pred_region
      %s1664 = ssub.s32 %s15, 2
      // Predicated region
      $region65: #{tpu_custom_call.1} parent=63 // pred_check
        %p1665 = pneg %p256
      $region66: #{tpu_custom_call.1} parent=63 // pred_check_branch
        %1667 = sbr.rel (%p1665) target = $region68
      $region67: #{tpu_custom_call.1} parent=63 // pred_region
        %s1668 = smul.u32 6, %s21
        %p1669 = scmp.lt.s32.totalorder %s1668, 47
        %s1670 = scalar_select %p1669, %s1668, 47
        %s1671 = smul.addr %s1670, 8
        %s1672 = scalar_lea.vmem %s9, %s1671
      $region68: #{tpu_custom_call.1} parent=63 // pred_fallthru
        _
    $region64: #{tpu_custom_call.1} parent=5 // pred_fallthru
      _
  $region6: #{tpu_custom_call.1} parent=0 // loop_footer
    %s19 = sadd.s32 1, %s15
  $region7: #{tpu_custom_call.1} parent=0 // loop_footer_branch
    %14 = sbr.rel target = $region3
  $region8: #{tpu_custom_call.1} parent=0 // loop_exit
    _

</llo_original>
